<compile_context>
chip_gen: v6e
topology: v6e:2x2x1
jax: 0.10.0
libtpu: 0.0.40
codegen_flags: <defaults>
</compile_context>

<pallas_src>
import jax
import jax.numpy as jnp
import numpy as np
from jax.experimental import pallas as pl
from jax.experimental.pallas import tpu as pltpu

# ---------------- shapes ----------------
B = 2         # grasp hypotheses
P = 32        # canonical gripper points
Z = 32        # vision latent dim
L = 32        # per-point latent (vision_decoder output)
HV = 64       # vision_decoder hidden
HF = 64       # feature_encoder hidden
W1 = HV + HF  # fused first-layer width == 128 lanes (one full vreg width)
F = 16        # feature_encoder output dim (psi)
HD = 128      # decoder hidden

# wd1 storage dtype: bf16 on v5e/v6e (HBM bytes dominate); use jnp.float32 on v7x to drop
# the in-loop bf16->f32 unpacks (3.2 TB/s HBM makes the extra 128 KB ~free there).
WD1_DTYPE = jnp.bfloat16


# ---------------- fused Pallas kernel (whole forward pass) ----------------
def fused_forward_kernel(k_ref, h_ref, pts_ref, wvzf_ref, wf2_ref, wd1_hbm, slab_ref,
                         e_ref, w8_ref, wd1_vmem, wd1_sem):
    """geometry -> (fused vision_decoder+feature_encoder) -> decoder, one invocation."""
    # Kick off the wd1 HBM->VMEM fetch immediately; it overlaps the MLP compute below.
    wd1_cp = pltpu.make_async_copy(wd1_hbm, wd1_vmem, wd1_sem)
    wd1_cp.start()

    slab = slab_ref[...]           # (16, 128) packed small params
    combo = slab[0:1, :]           # [ z@wv1z + bv1 | bf1 + bv2@wf1z ]   (hoisted/fused biases)
    wf1k  = slab[2:3, :]           # lanes HV: hold wf1k, lanes :HV zero
    bd1   = slab[4:5, :]           # decoder bias, bf2 contribution folded in
    wd2r  = slab[5:6, :]           # decoder second layer, transposed to a row
    bd2   = slab[6:7, 0:1]
    wpp0  = slab[8:9, :]           # rows of the fused point weight [wv1p | wf1p]
    wpp1  = slab[9:10, :]
    wpp2  = slab[10:11, :]

    # Build the fused first-layer weight for BOTH hypotheses: W8 (4*B, 128).
    #   row 4b+j (j<3) = sum_i H[b,i,j] * wpp_i                    (rotation column fold)
    #   row 4b+3       = sum_i H[b,i,3] * wpp_i + combo + k_b*wf1k (translation + all biases)
    for b in range(B):
        for j in range(3):
            w8_ref[pl.ds(4 * b + j, 1), :] = (h_ref[b, 0 * 4 + j] * wpp0
                                              + h_ref[b, 1 * 4 + j] * wpp1
                                              + h_ref[b, 2 * 4 + j] * wpp2)
        w8_ref[pl.ds(4 * b + 3, 1), :] = (combo + k_ref[b] * wf1k
                                          + h_ref[b, 3] * wpp0
                                          + h_ref[b, 7] * wpp1
                                          + h_ref[b, 11] * wpp2)

    # One MXU dot gives the fused first-layer pre-activation for all B*P points at once.
    t1 = jnp.dot(pts_ref[...], w8_ref[...],
                 preferred_element_type=jnp.float32)                         # (B*P, 128)
    r1 = jnp.maximum(t1, 0.0)
    # feature_encoder hidden with vision_decoder folded in:  g_pre = t1 + relu(t1) @ (wv2@wf1z)
    g_pre = t1 + jnp.dot(r1, wvzf_ref[...],
                         preferred_element_type=jnp.float32)                 # (B*P, 128)
    psi = jnp.dot(jnp.maximum(g_pre, 0.0), wf2_ref[...],
                  preferred_element_type=jnp.float32)                        # (B*P, F)

    wd1_cp.wait()   # decoder layer-1 weights resident from here on

    # decoder layer 1: hd_b = relu(sum_{p,f} psi[b,p,f] * wd1[f-block][p,:] + bd1')
    # per-f VPU FMA; each wd1 slice loaded/cast ONCE (shared by both b); 4 accumulator chains.
    acc = [[None, None] for _ in range(B)]
    for f in range(F):
        w_f = wd1_vmem[pl.ds(f * P, P), :].astype(jnp.float32)               # (P, HD)
        for b in range(B):
            term = psi[b * P:(b + 1) * P, f:f + 1] * w_f                     # (P, HD)
            s = f & 1
            acc[b][s] = term if acc[b][s] is None else acc[b][s] + term

    for b in range(B):
        tot = acc[b][0] + acc[b][1]                                          # (P, HD)
        hd = jnp.maximum(jnp.sum(tot, axis=0, keepdims=True) + bd1, 0.0)     # (1, HD)
        # decoder layer 2: single output column -> VPU mul + lane reduce (no MXU pass)
        e_b = jnp.sum(hd * wd2r, axis=1, keepdims=True) + bd2                # (1, 1)
        e_ref[pl.ds(b, 1), :] = e_b


# ---------------- parameter synthesis & one-time repacking ----------------
def init_params(key):
    keys = jax.random.split(key, 20)

    def w(k_, shape, scale=None):
        s = 1.0 / np.sqrt(shape[0]) if scale is None else scale
        return (jax.random.normal(k_, shape, jnp.float32) * s).astype(jnp.float32)

    return {
        # vision_encoder (set_latent path, plain JAX)
        "wenc": w(keys[0], (3, Z)), "benc": w(keys[10], (1, Z), 0.1),
        # vision_decoder
        "wv1p": w(keys[1], (3, HV)), "wv1z": w(keys[2], (Z, HV)),
        "bv1": w(keys[11], (1, HV), 0.1),
        "wv2": w(keys[3], (HV, L)), "bv2": w(keys[12], (1, L), 0.1),
        # feature_encoder
        "wf1p": w(keys[4], (3, HF)), "wf1k": w(keys[5], (1, HF)), "wf1z": w(keys[6], (L, HF)),
        "bf1": w(keys[13], (1, HF), 0.1),
        "wf2": w(keys[7], (HF, F)), "bf2": w(keys[14], (1, F), 0.1),
        # decoder
        "wd1": w(keys[8], (P * F, HD)), "bd1": w(keys[15], (1, HD), 0.1),
        "wd2": w(keys[9], (HD, 1)), "bd2": w(keys[16], (1, 1), 0.1),
    }


def vision_encoder(params, O):
    # set_latent(): O.squeeze(1) -> pooled point MLP -> z  (setup, not the hot path)
    # TODO(synk): the real conv/VNN vision_encoder backbone is not specified; synthesized
    # here as a pooled point MLP in plain JAX (it only produces the latent z once).
    x = jnp.mean(O, axis=1)                                              # (1, 3)
    return jnp.tanh(x @ params["wenc"] + params["benc"])                 # (1, Z)


def prepare(params, z, points):
    """One-time repack after set_latent: fuse/fold/pad/pack weights for the fused kernel."""
    f32 = jnp.float32
    with jax.default_matmul_precision("highest"):
        zc = z @ params["wv1z"] + params["bv1"]                    # hoisted latent term (1,HV)
        bvf = params["bv2"] @ params["wf1z"]                       # bv2 folded forward  (1,HF)
        wvzf_core = params["wv2"] @ params["wf1z"]                 # fused wv2@wf1z     (HV,HF)
        wd1_q = params["wd1"].astype(WD1_DTYPE).astype(f32)        # decoder weight as seen in-kernel
        bf2_flat = jnp.tile(params["bf2"], (1, P))                 # [0, p*F+f] = bf2[f]
        bd1p = params["bd1"] + bf2_flat @ wd1_q                    # bf2 folded into decoder bias

    slab = jnp.zeros((16, 128), f32)
    slab = slab.at[0, :HV].set(zc[0]).at[0, HV:].set(params["bf1"][0] + bvf[0])
    slab = slab.at[2, HV:].set(params["wf1k"][0])
    slab = slab.at[4, :HD].set(bd1p[0])
    slab = slab.at[5, :HD].set(params["wd2"][:, 0])
    slab = slab.at[6, 0].set(params["bd2"][0, 0])
    slab = slab.at[8:11, :].set(jnp.concatenate([params["wv1p"], params["wf1p"]], axis=1))

    wvzf = jnp.zeros((W1, W1), f32).at[:HV, HV:].set(wvzf_core)                      # (128,128)
    wf2_pad = jnp.concatenate([jnp.zeros((HV, F), f32), params["wf2"]], axis=0)      # (128, F)

    # decoder first-layer weight permuted into contiguous (P, HD) f-blocks; stored in WD1_DTYPE
    # (bf16 on v5e/v6e: dominant HBM bytes); accumulation stays f32 in-kernel.
    wd1_fp = (params["wd1"].reshape(P, F, HD).transpose(1, 0, 2)
              .reshape(F * P, HD).astype(WD1_DTYPE))

    # block-diagonal augmented point buffer: rows b*P:(b+1)*P use cols 4b:4b+4 = [points | 1],
    # so a single (B*P, 4B) @ (4B, 128) MXU dot applies each hypothesis's fused weight.
    pts_aug = jnp.zeros((B * P, 4 * B), f32)
    for b in range(B):
        pts_aug = pts_aug.at[b * P:(b + 1) * P, 4 * b:4 * b + 3].set(points)
        pts_aug = pts_aug.at[b * P:(b + 1) * P, 4 * b + 3].set(1.0)

    return {"slab": slab, "wvzf": wvzf, "wf2": wf2_pad, "wd1": wd1_fp, "pts_aug": pts_aug}


# ---------------- forward (single pallas_call) ----------------
@jax.jit
def forward(prep, H, k):
    """ConvGraspDiffusionFields.forward(H, k, batch=1) -> energy e of shape (B,)."""
    flops = 2 * (B * P) * (4 * B * W1 + W1 * W1 + W1 * F) + 2 * B * (P * F * HD + HD)
    bytes_accessed = ((prep["pts_aug"].size + prep["wvzf"].size + prep["wf2"].size +
                       prep["slab"].size + H.size + k.size + B) * 4
                      + prep["wd1"].size * prep["wd1"].dtype.itemsize)
    e = pl.pallas_call(
        fused_forward_kernel,
        out_shape=jax.ShapeDtypeStruct((B, 1), jnp.float32),
        in_specs=[
            pl.BlockSpec(memory_space=pltpu.MemorySpace.SMEM),   # k        (B,)
            pl.BlockSpec(memory_space=pltpu.MemorySpace.SMEM),   # H flat   (B, 16)
            pl.BlockSpec(memory_space=pltpu.MemorySpace.VMEM),   # pts_aug  (B*P, 4B)
            pl.BlockSpec(memory_space=pltpu.MemorySpace.VMEM),   # wvzf     (128, 128)
            pl.BlockSpec(memory_space=pltpu.MemorySpace.VMEM),   # wf2_pad  (128, F)
            pl.BlockSpec(memory_space=pl.ANY),                   # wd1      (F*P, HD) manual DMA
            pl.BlockSpec(memory_space=pltpu.MemorySpace.VMEM),   # packed slab (16, 128)
        ],
        out_specs=pl.BlockSpec(memory_space=pltpu.MemorySpace.VMEM),
        scratch_shapes=[
            pltpu.VMEM((4 * B, W1), jnp.float32),    # fused per-hypothesis first-layer weight
            pltpu.VMEM((F * P, HD), WD1_DTYPE),      # wd1 landing buffer (DMA target)
            pltpu.SemaphoreType.DMA,                 # wd1 DMA completion semaphore
        ],
        cost_estimate=pl.CostEstimate(flops=flops, transcendentals=0,
                                      bytes_accessed=bytes_accessed),
    )(k, H.reshape(B, 16), prep["pts_aug"], prep["wvzf"], prep["wf2"],
      prep["wd1"], prep["slab"])
    return e[:, 0]


# ---------------- pure-JAX reference (PyTorch-faithful concat form) ----------------
def forward_ref(params, z, H, k, points):
    with jax.default_matmul_precision("highest"):
        R, t = H[:, :3, :3], H[:, :3, 3]
        p = jnp.einsum("bij,pj->bpi", R, points) + t[:, None, :]        # geometry_encoder
        p_flat = p.reshape(-1, 3)
        k_ext = jnp.repeat(k[:, None], P, axis=1).reshape(-1, 1)
        z_b = jnp.broadcast_to(z, (B * P, Z))
        h = jnp.maximum(jnp.concatenate([p_flat, z_b], -1)
                        @ jnp.concatenate([params["wv1p"], params["wv1z"]], 0)
                        + params["bv1"], 0.0)
        z_ext = h @ params["wv2"] + params["bv2"]                       # vision_decoder
        g = jnp.maximum(jnp.concatenate([p_flat, k_ext, z_ext], -1)
                        @ jnp.concatenate([params["wf1p"], params["wf1k"], params["wf1z"]], 0)
                        + params["bf1"], 0.0)
        psi = g @ params["wf2"] + params["bf2"]                         # feature_encoder
        psi_flat = psi.reshape(B, P * F)
        wd1_q = params["wd1"].astype(WD1_DTYPE).astype(jnp.float32)     # same quantized wd1
        hd = jnp.maximum(psi_flat @ wd1_q + params["bd1"], 0.0)
        return (hd @ params["wd2"] + params["bd2"])[:, 0]               # decoder


if __name__ == "__main__":
    key = jax.random.PRNGKey(0)
    kp, ko, kh, kk, kpt = jax.random.split(key, 5)

    params = init_params(kp)
    points = jax.random.normal(kpt, (P, 3), jnp.float32) * 0.05          # gripper point buffer

    # SE(3)-ish grasp poses H: near-identity rotation + translation, bottom row [0,0,0,1]
    top = jax.random.normal(kh, (B, 3, 4), jnp.float32) * 0.1
    top = top.at[:, :, :3].add(jnp.eye(3)[None])
    bottom = jnp.tile(jnp.array([[0.0, 0.0, 0.0, 1.0]], jnp.float32), (B, 1))[:, None, :]
    H = jnp.concatenate([top, bottom], axis=1)                            # (B, 4, 4)
    k = jax.random.uniform(kk, (B,), jnp.float32)                         # diffusion time

    # set_latent(): vision_encoder on an observation point cloud (plain-JAX setup path)
    O = jax.random.normal(ko, (1, 128, 3), jnp.float32)                   # O.squeeze(1)
    z = vision_encoder(params, O)                                         # (1, Z)
    prep = prepare(params, z, points)                                     # one-time repack/fuse

    e = jax.block_until_ready(forward(prep, H, k))
    e_ref = forward_ref(params, z, H, k, points)
    assert e.shape == (B,) and e.dtype == jnp.float32
    assert bool(jnp.allclose(e, e_ref, atol=1e-4, rtol=1e-3)), (e, e_ref)
    print("KERNEL_OK")
</pallas_src>

<mosaic_0001>
module attributes {stable_mosaic.version = 11 : i64} {
  func.func @fused_forward_kernel(%arg0: memref<2xf32, #tpu.memory_space<smem>>, %arg1: memref<2x16xf32, #tpu.memory_space<smem>>, %arg2: memref<64x8xf32, #tpu.memory_space<vmem>>, %arg3: memref<128x128xf32, #tpu.memory_space<vmem>>, %arg4: memref<128x16xf32, #tpu.memory_space<vmem>>, %arg5: memref<512x128xbf16, #tpu.memory_space<any>>, %arg6: memref<16x128xf32, #tpu.memory_space<vmem>>, %arg7: memref<2x1xf32, #tpu.memory_space<vmem>>, %arg8: memref<8x128xf32, #tpu.memory_space<vmem>>, %arg9: memref<512x128xbf16, #tpu.memory_space<vmem>>, %arg10: memref<!tpu.dma_semaphore, #tpu.memory_space<semaphore_mem>>) attributes {dimension_semantics = [], scalar_prefetch = 0 : i64, scratch_operands = 3 : i64, tpu.core_type = #tpu.core_type<tc>} {
    tpu.enqueue_dma source(%arg5 : memref<512x128xbf16, #tpu.memory_space<any>>) target(%arg9 : memref<512x128xbf16, #tpu.memory_space<vmem>>) target_semaphore(%arg10 : memref<!tpu.dma_semaphore, #tpu.memory_space<semaphore_mem>>)
    %c0 = arith.constant 0 : index
    %c0_0 = arith.constant 0 : index
    %0 = vector.load %arg6[%c0, %c0_0] : memref<16x128xf32, #tpu.memory_space<vmem>>, vector<16x128xf32>
    %1 = vector.extract_strided_slice %0 {offsets = [0, 0], sizes = [1, 128], strides = [1, 1]} : vector<16x128xf32> to vector<1x128xf32>
    %2 = vector.extract_strided_slice %0 {offsets = [2, 0], sizes = [1, 128], strides = [1, 1]} : vector<16x128xf32> to vector<1x128xf32>
    %3 = vector.extract_strided_slice %0 {offsets = [4, 0], sizes = [1, 128], strides = [1, 1]} : vector<16x128xf32> to vector<1x128xf32>
    %4 = vector.extract_strided_slice %0 {offsets = [5, 0], sizes = [1, 128], strides = [1, 1]} : vector<16x128xf32> to vector<1x128xf32>
    %5 = vector.extract_strided_slice %0 {offsets = [6, 0], sizes = [1, 1], strides = [1, 1]} : vector<16x128xf32> to vector<1x1xf32>
    %6 = vector.extract_strided_slice %0 {offsets = [8, 0], sizes = [1, 128], strides = [1, 1]} : vector<16x128xf32> to vector<1x128xf32>
    %7 = vector.extract_strided_slice %0 {offsets = [9, 0], sizes = [1, 128], strides = [1, 1]} : vector<16x128xf32> to vector<1x128xf32>
    %8 = vector.extract_strided_slice %0 {offsets = [10, 0], sizes = [1, 128], strides = [1, 1]} : vector<16x128xf32> to vector<1x128xf32>
    %c0_1 = arith.constant 0 : index
    %c0_2 = arith.constant 0 : index
    %9 = memref.load %arg1[%c0_1, %c0_2] : memref<2x16xf32, #tpu.memory_space<smem>>
    %10 = vector.broadcast %9 : f32 to vector<1x128xf32>
    %11 = arith.mulf %10, %6 : vector<1x128xf32>
    %c0_3 = arith.constant 0 : index
    %c4 = arith.constant 4 : index
    %12 = memref.load %arg1[%c0_3, %c4] : memref<2x16xf32, #tpu.memory_space<smem>>
    %13 = vector.broadcast %12 : f32 to vector<1x128xf32>
    %14 = arith.mulf %13, %7 : vector<1x128xf32>
    %15 = arith.addf %11, %14 : vector<1x128xf32>
    %c0_4 = arith.constant 0 : index
    %c8 = arith.constant 8 : index
    %16 = memref.load %arg1[%c0_4, %c8] : memref<2x16xf32, #tpu.memory_space<smem>>
    %17 = vector.broadcast %16 : f32 to vector<1x128xf32>
    %18 = arith.mulf %17, %8 : vector<1x128xf32>
    %19 = arith.addf %15, %18 : vector<1x128xf32>
    %c0_5 = arith.constant 0 : index
    %c0_6 = arith.constant 0 : index
    %20 = vector.load %arg8[%c0_5, %c0_6] : memref<8x128xf32, #tpu.memory_space<vmem>>, vector<1x128xf32>
    tpu.vector_store %arg8[%c0_5, %c0_6], %19 {strides = array<i32>} : memref<8x128xf32, #tpu.memory_space<vmem>>, vector<1x128xf32>,
    %c0_7 = arith.constant 0 : index
    %c1 = arith.constant 1 : index
    %21 = memref.load %arg1[%c0_7, %c1] : memref<2x16xf32, #tpu.memory_space<smem>>
    %22 = vector.broadcast %21 : f32 to vector<1x128xf32>
    %23 = arith.mulf %22, %6 : vector<1x128xf32>
    %c0_8 = arith.constant 0 : index
    %c5 = arith.constant 5 : index
    %24 = memref.load %arg1[%c0_8, %c5] : memref<2x16xf32, #tpu.memory_space<smem>>
    %25 = vector.broadcast %24 : f32 to vector<1x128xf32>
    %26 = arith.mulf %25, %7 : vector<1x128xf32>
    %27 = arith.addf %23, %26 : vector<1x128xf32>
    %c0_9 = arith.constant 0 : index
    %c9 = arith.constant 9 : index
    %28 = memref.load %arg1[%c0_9, %c9] : memref<2x16xf32, #tpu.memory_space<smem>>
    %29 = vector.broadcast %28 : f32 to vector<1x128xf32>
    %30 = arith.mulf %29, %8 : vector<1x128xf32>
    %31 = arith.addf %27, %30 : vector<1x128xf32>
    %c1_10 = arith.constant 1 : index
    %c0_11 = arith.constant 0 : index
    %32 = vector.load %arg8[%c1_10, %c0_11] : memref<8x128xf32, #tpu.memory_space<vmem>>, vector<1x128xf32>
    tpu.vector_store %arg8[%c1_10, %c0_11], %31 {strides = array<i32>} : memref<8x128xf32, #tpu.memory_space<vmem>>, vector<1x128xf32>,
    %c0_12 = arith.constant 0 : index
    %c2 = arith.constant 2 : index
    %33 = memref.load %arg1[%c0_12, %c2] : memref<2x16xf32, #tpu.memory_space<smem>>
    %34 = vector.broadcast %33 : f32 to vector<1x128xf32>
    %35 = arith.mulf %34, %6 : vector<1x128xf32>
    %c0_13 = arith.constant 0 : index
    %c6 = arith.constant 6 : index
    %36 = memref.load %arg1[%c0_13, %c6] : memref<2x16xf32, #tpu.memory_space<smem>>
    %37 = vector.broadcast %36 : f32 to vector<1x128xf32>
    %38 = arith.mulf %37, %7 : vector<1x128xf32>
    %39 = arith.addf %35, %38 : vector<1x128xf32>
    %c0_14 = arith.constant 0 : index
    %c10 = arith.constant 10 : index
    %40 = memref.load %arg1[%c0_14, %c10] : memref<2x16xf32, #tpu.memory_space<smem>>
    %41 = vector.broadcast %40 : f32 to vector<1x128xf32>
    %42 = arith.mulf %41, %8 : vector<1x128xf32>
    %43 = arith.addf %39, %42 : vector<1x128xf32>
    %c2_15 = arith.constant 2 : index
    %c0_16 = arith.constant 0 : index
    %44 = vector.load %arg8[%c2_15, %c0_16] : memref<8x128xf32, #tpu.memory_space<vmem>>, vector<1x128xf32>
    tpu.vector_store %arg8[%c2_15, %c0_16], %43 {strides = array<i32>} : memref<8x128xf32, #tpu.memory_space<vmem>>, vector<1x128xf32>,
    %c0_17 = arith.constant 0 : index
    %45 = memref.load %arg0[%c0_17] : memref<2xf32, #tpu.memory_space<smem>>
    %46 = vector.broadcast %45 : f32 to vector<1x128xf32>
    %47 = arith.mulf %46, %2 : vector<1x128xf32>
    %48 = arith.addf %1, %47 : vector<1x128xf32>
    %c0_18 = arith.constant 0 : index
    %c3 = arith.constant 3 : index
    %49 = memref.load %arg1[%c0_18, %c3] : memref<2x16xf32, #tpu.memory_space<smem>>
    %50 = vector.broadcast %49 : f32 to vector<1x128xf32>
    %51 = arith.mulf %50, %6 : vector<1x128xf32>
    %52 = arith.addf %48, %51 : vector<1x128xf32>
    %c0_19 = arith.constant 0 : index
    %c7 = arith.constant 7 : index
    %53 = memref.load %arg1[%c0_19, %c7] : memref<2x16xf32, #tpu.memory_space<smem>>
    %54 = vector.broadcast %53 : f32 to vector<1x128xf32>
    %55 = arith.mulf %54, %7 : vector<1x128xf32>
    %56 = arith.addf %52, %55 : vector<1x128xf32>
    %c0_20 = arith.constant 0 : index
    %c11 = arith.constant 11 : index
    %57 = memref.load %arg1[%c0_20, %c11] : memref<2x16xf32, #tpu.memory_space<smem>>
    %58 = vector.broadcast %57 : f32 to vector<1x128xf32>
    %59 = arith.mulf %58, %8 : vector<1x128xf32>
    %60 = arith.addf %56, %59 : vector<1x128xf32>
    %c3_21 = arith.constant 3 : index
    %c0_22 = arith.constant 0 : index
    %61 = vector.load %arg8[%c3_21, %c0_22] : memref<8x128xf32, #tpu.memory_space<vmem>>, vector<1x128xf32>
    tpu.vector_store %arg8[%c3_21, %c0_22], %60 {strides = array<i32>} : memref<8x128xf32, #tpu.memory_space<vmem>>, vector<1x128xf32>,
    %c1_23 = arith.constant 1 : index
    %c0_24 = arith.constant 0 : index
    %62 = memref.load %arg1[%c1_23, %c0_24] : memref<2x16xf32, #tpu.memory_space<smem>>
    %63 = vector.broadcast %62 : f32 to vector<1x128xf32>
    %64 = arith.mulf %63, %6 : vector<1x128xf32>
    %c1_25 = arith.constant 1 : index
    %c4_26 = arith.constant 4 : index
    %65 = memref.load %arg1[%c1_25, %c4_26] : memref<2x16xf32, #tpu.memory_space<smem>>
    %66 = vector.broadcast %65 : f32 to vector<1x128xf32>
    %67 = arith.mulf %66, %7 : vector<1x128xf32>
    %68 = arith.addf %64, %67 : vector<1x128xf32>
    %c1_27 = arith.constant 1 : index
    %c8_28 = arith.constant 8 : index
    %69 = memref.load %arg1[%c1_27, %c8_28] : memref<2x16xf32, #tpu.memory_space<smem>>
    %70 = vector.broadcast %69 : f32 to vector<1x128xf32>
    %71 = arith.mulf %70, %8 : vector<1x128xf32>
    %72 = arith.addf %68, %71 : vector<1x128xf32>
    %c4_29 = arith.constant 4 : index
    %c0_30 = arith.constant 0 : index
    %73 = vector.load %arg8[%c4_29, %c0_30] : memref<8x128xf32, #tpu.memory_space<vmem>>, vector<1x128xf32>
    tpu.vector_store %arg8[%c4_29, %c0_30], %72 {strides = array<i32>} : memref<8x128xf32, #tpu.memory_space<vmem>>, vector<1x128xf32>,
    %c1_31 = arith.constant 1 : index
    %c1_32 = arith.constant 1 : index
    %74 = memref.load %arg1[%c1_31, %c1_32] : memref<2x16xf32, #tpu.memory_space<smem>>
    %75 = vector.broadcast %74 : f32 to vector<1x128xf32>
    %76 = arith.mulf %75, %6 : vector<1x128xf32>
    %c1_33 = arith.constant 1 : index
    %c5_34 = arith.constant 5 : index
    %77 = memref.load %arg1[%c1_33, %c5_34] : memref<2x16xf32, #tpu.memory_space<smem>>
    %78 = vector.broadcast %77 : f32 to vector<1x128xf32>
    %79 = arith.mulf %78, %7 : vector<1x128xf32>
    %80 = arith.addf %76, %79 : vector<1x128xf32>
    %c1_35 = arith.constant 1 : index
    %c9_36 = arith.constant 9 : index
    %81 = memref.load %arg1[%c1_35, %c9_36] : memref<2x16xf32, #tpu.memory_space<smem>>
    %82 = vector.broadcast %81 : f32 to vector<1x128xf32>
    %83 = arith.mulf %82, %8 : vector<1x128xf32>
    %84 = arith.addf %80, %83 : vector<1x128xf32>
    %c5_37 = arith.constant 5 : index
    %c0_38 = arith.constant 0 : index
    %85 = vector.load %arg8[%c5_37, %c0_38] : memref<8x128xf32, #tpu.memory_space<vmem>>, vector<1x128xf32>
    tpu.vector_store %arg8[%c5_37, %c0_38], %84 {strides = array<i32>} : memref<8x128xf32, #tpu.memory_space<vmem>>, vector<1x128xf32>,
    %c1_39 = arith.constant 1 : index
    %c2_40 = arith.constant 2 : index
    %86 = memref.load %arg1[%c1_39, %c2_40] : memref<2x16xf32, #tpu.memory_space<smem>>
    %87 = vector.broadcast %86 : f32 to vector<1x128xf32>
    %88 = arith.mulf %87, %6 : vector<1x128xf32>
    %c1_41 = arith.constant 1 : index
    %c6_42 = arith.constant 6 : index
    %89 = memref.load %arg1[%c1_41, %c6_42] : memref<2x16xf32, #tpu.memory_space<smem>>
    %90 = vector.broadcast %89 : f32 to vector<1x128xf32>
    %91 = arith.mulf %90, %7 : vector<1x128xf32>
    %92 = arith.addf %88, %91 : vector<1x128xf32>
    %c1_43 = arith.constant 1 : index
    %c10_44 = arith.constant 10 : index
    %93 = memref.load %arg1[%c1_43, %c10_44] : memref<2x16xf32, #tpu.memory_space<smem>>
    %94 = vector.broadcast %93 : f32 to vector<1x128xf32>
    %95 = arith.mulf %94, %8 : vector<1x128xf32>
    %96 = arith.addf %92, %95 : vector<1x128xf32>
    %c6_45 = arith.constant 6 : index
    %c0_46 = arith.constant 0 : index
    %97 = vector.load %arg8[%c6_45, %c0_46] : memref<8x128xf32, #tpu.memory_space<vmem>>, vector<1x128xf32>
    tpu.vector_store %arg8[%c6_45, %c0_46], %96 {strides = array<i32>} : memref<8x128xf32, #tpu.memory_space<vmem>>, vector<1x128xf32>,
    %c1_47 = arith.constant 1 : index
    %98 = memref.load %arg0[%c1_47] : memref<2xf32, #tpu.memory_space<smem>>
    %99 = vector.broadcast %98 : f32 to vector<1x128xf32>
    %100 = arith.mulf %99, %2 : vector<1x128xf32>
    %101 = arith.addf %1, %100 : vector<1x128xf32>
    %c1_48 = arith.constant 1 : index
    %c3_49 = arith.constant 3 : index
    %102 = memref.load %arg1[%c1_48, %c3_49] : memref<2x16xf32, #tpu.memory_space<smem>>
    %103 = vector.broadcast %102 : f32 to vector<1x128xf32>
    %104 = arith.mulf %103, %6 : vector<1x128xf32>
    %105 = arith.addf %101, %104 : vector<1x128xf32>
    %c1_50 = arith.constant 1 : index
    %c7_51 = arith.constant 7 : index
    %106 = memref.load %arg1[%c1_50, %c7_51] : memref<2x16xf32, #tpu.memory_space<smem>>
    %107 = vector.broadcast %106 : f32 to vector<1x128xf32>
    %108 = arith.mulf %107, %7 : vector<1x128xf32>
    %109 = arith.addf %105, %108 : vector<1x128xf32>
    %c1_52 = arith.constant 1 : index
    %c11_53 = arith.constant 11 : index
    %110 = memref.load %arg1[%c1_52, %c11_53] : memref<2x16xf32, #tpu.memory_space<smem>>
    %111 = vector.broadcast %110 : f32 to vector<1x128xf32>
    %112 = arith.mulf %111, %8 : vector<1x128xf32>
    %113 = arith.addf %109, %112 : vector<1x128xf32>
    %c7_54 = arith.constant 7 : index
    %c0_55 = arith.constant 0 : index
    %114 = vector.load %arg8[%c7_54, %c0_55] : memref<8x128xf32, #tpu.memory_space<vmem>>, vector<1x128xf32>
    tpu.vector_store %arg8[%c7_54, %c0_55], %113 {strides = array<i32>} : memref<8x128xf32, #tpu.memory_space<vmem>>, vector<1x128xf32>,
    %c0_56 = arith.constant 0 : index
    %c0_57 = arith.constant 0 : index
    %115 = vector.load %arg2[%c0_56, %c0_57] : memref<64x8xf32, #tpu.memory_space<vmem>>, vector<64x8xf32>
    %c0_58 = arith.constant 0 : index
    %c0_59 = arith.constant 0 : index
    %116 = vector.load %arg8[%c0_58, %c0_59] : memref<8x128xf32, #tpu.memory_space<vmem>>, vector<8x128xf32>
    %cst = arith.constant dense<0.000000e+00> : vector<64x128xf32>
    %117 = tpu.matmul %115, %116, %cst {dimension_numbers = #tpu.dot_dimension_numbers<[1], [0], [0], [1], [0, 0, 1, 1], [], []>} : vector<64x8xf32>, vector<8x128xf32>, vector<64x128xf32> -> vector<64x128xf32>
    %cst_60 = arith.constant 0.000000e+00 : f32
    %118 = vector.broadcast %cst_60 : f32 to vector<64x128xf32>
    %119 = arith.maximumf %117, %118 : vector<64x128xf32>
    %c0_61 = arith.constant 0 : index
    %c0_62 = arith.constant 0 : index
    %120 = vector.load %arg3[%c0_61, %c0_62] : memref<128x128xf32, #tpu.memory_space<vmem>>, vector<128x128xf32>
    %cst_63 = arith.constant dense<0.000000e+00> : vector<64x128xf32>
    %121 = tpu.matmul %119, %120, %cst_63 {dimension_numbers = #tpu.dot_dimension_numbers<[1], [0], [0], [1], [0, 0, 1, 1], [], []>} : vector<64x128xf32>, vector<128x128xf32>, vector<64x128xf32> -> vector<64x128xf32>
    %122 = arith.addf %117, %121 : vector<64x128xf32>
    %cst_64 = arith.constant 0.000000e+00 : f32
    %123 = vector.broadcast %cst_64 : f32 to vector<64x128xf32>
    %124 = arith.maximumf %122, %123 : vector<64x128xf32>
    %c0_65 = arith.constant 0 : index
    %c0_66 = arith.constant 0 : index
    %125 = vector.load %arg4[%c0_65, %c0_66] : memref<128x16xf32, #tpu.memory_space<vmem>>, vector<128x16xf32>
    %cst_67 = arith.constant dense<0.000000e+00> : vector<64x16xf32>
    %126 = tpu.matmul %124, %125, %cst_67 {dimension_numbers = #tpu.dot_dimension_numbers<[1], [0], [0], [1], [0, 0, 1, 1], [], []>} : vector<64x128xf32>, vector<128x16xf32>, vector<64x16xf32> -> vector<64x16xf32>
    tpu.wait_dma2 semaphore(%arg10 : memref<!tpu.dma_semaphore, #tpu.memory_space<semaphore_mem>>) src(%arg5 : memref<512x128xbf16, #tpu.memory_space<any>>) dst(%arg9 : memref<512x128xbf16, #tpu.memory_space<vmem>>)
    %c0_68 = arith.constant 0 : index
    %c0_69 = arith.constant 0 : index
    %127 = vector.load %arg9[%c0_68, %c0_69] : memref<512x128xbf16, #tpu.memory_space<vmem>>, vector<32x128xbf16>
    %128 = arith.extf %127 : vector<32x128xbf16> to vector<32x128xf32>
    %129 = vector.extract_strided_slice %126 {offsets = [0, 0], sizes = [32, 1], strides = [1, 1]} : vector<64x16xf32> to vector<32x1xf32>
    %130 = vector.broadcast %129 : vector<32x1xf32> to vector<32x128xf32>
    %131 = arith.mulf %130, %128 : vector<32x128xf32>
    %132 = vector.extract_strided_slice %126 {offsets = [32, 0], sizes = [32, 1], strides = [1, 1]} : vector<64x16xf32> to vector<32x1xf32>
    %133 = vector.broadcast %132 : vector<32x1xf32> to vector<32x128xf32>
    %134 = arith.mulf %133, %128 : vector<32x128xf32>
    %c32 = arith.constant 32 : index
    %c0_70 = arith.constant 0 : index
    %135 = vector.load %arg9[%c32, %c0_70] : memref<512x128xbf16, #tpu.memory_space<vmem>>, vector<32x128xbf16>
    %136 = arith.extf %135 : vector<32x128xbf16> to vector<32x128xf32>
    %137 = vector.extract_strided_slice %126 {offsets = [0, 1], sizes = [32, 1], strides = [1, 1]} : vector<64x16xf32> to vector<32x1xf32>
    %138 = vector.broadcast %137 : vector<32x1xf32> to vector<32x128xf32>
    %139 = arith.mulf %138, %136 : vector<32x128xf32>
    %140 = vector.extract_strided_slice %126 {offsets = [32, 1], sizes = [32, 1], strides = [1, 1]} : vector<64x16xf32> to vector<32x1xf32>
    %141 = vector.broadcast %140 : vector<32x1xf32> to vector<32x128xf32>
    %142 = arith.mulf %141, %136 : vector<32x128xf32>
    %c64 = arith.constant 64 : index
    %c0_71 = arith.constant 0 : index
    %143 = vector.load %arg9[%c64, %c0_71] : memref<512x128xbf16, #tpu.memory_space<vmem>>, vector<32x128xbf16>
    %144 = arith.extf %143 : vector<32x128xbf16> to vector<32x128xf32>
    %145 = vector.extract_strided_slice %126 {offsets = [0, 2], sizes = [32, 1], strides = [1, 1]} : vector<64x16xf32> to vector<32x1xf32>
    %146 = vector.broadcast %145 : vector<32x1xf32> to vector<32x128xf32>
    %147 = arith.mulf %146, %144 : vector<32x128xf32>
    %148 = arith.addf %131, %147 : vector<32x128xf32>
    %149 = vector.extract_strided_slice %126 {offsets = [32, 2], sizes = [32, 1], strides = [1, 1]} : vector<64x16xf32> to vector<32x1xf32>
    %150 = vector.broadcast %149 : vector<32x1xf32> to vector<32x128xf32>
    %151 = arith.mulf %150, %144 : vector<32x128xf32>
    %152 = arith.addf %134, %151 : vector<32x128xf32>
    %c96 = arith.constant 96 : index
    %c0_72 = arith.constant 0 : index
    %153 = vector.load %arg9[%c96, %c0_72] : memref<512x128xbf16, #tpu.memory_space<vmem>>, vector<32x128xbf16>
    %154 = arith.extf %153 : vector<32x128xbf16> to vector<32x128xf32>
    %155 = vector.extract_strided_slice %126 {offsets = [0, 3], sizes = [32, 1], strides = [1, 1]} : vector<64x16xf32> to vector<32x1xf32>
    %156 = vector.broadcast %155 : vector<32x1xf32> to vector<32x128xf32>
    %157 = arith.mulf %156, %154 : vector<32x128xf32>
    %158 = arith.addf %139, %157 : vector<32x128xf32>
    %159 = vector.extract_strided_slice %126 {offsets = [32, 3], sizes = [32, 1], strides = [1, 1]} : vector<64x16xf32> to vector<32x1xf32>
    %160 = vector.broadcast %159 : vector<32x1xf32> to vector<32x128xf32>
    %161 = arith.mulf %160, %154 : vector<32x128xf32>
    %162 = arith.addf %142, %161 : vector<32x128xf32>
    %c128 = arith.constant 128 : index
    %c0_73 = arith.constant 0 : index
    %163 = vector.load %arg9[%c128, %c0_73] : memref<512x128xbf16, #tpu.memory_space<vmem>>, vector<32x128xbf16>
    %164 = arith.extf %163 : vector<32x128xbf16> to vector<32x128xf32>
    %165 = vector.extract_strided_slice %126 {offsets = [0, 4], sizes = [32, 1], strides = [1, 1]} : vector<64x16xf32> to vector<32x1xf32>
    %166 = vector.broadcast %165 : vector<32x1xf32> to vector<32x128xf32>
    %167 = arith.mulf %166, %164 : vector<32x128xf32>
    %168 = arith.addf %148, %167 : vector<32x128xf32>
    %169 = vector.extract_strided_slice %126 {offsets = [32, 4], sizes = [32, 1], strides = [1, 1]} : vector<64x16xf32> to vector<32x1xf32>
    %170 = vector.broadcast %169 : vector<32x1xf32> to vector<32x128xf32>
    %171 = arith.mulf %170, %164 : vector<32x128xf32>
    %172 = arith.addf %152, %171 : vector<32x128xf32>
    %c160 = arith.constant 160 : index
    %c0_74 = arith.constant 0 : index
    %173 = vector.load %arg9[%c160, %c0_74] : memref<512x128xbf16, #tpu.memory_space<vmem>>, vector<32x128xbf16>
    %174 = arith.extf %173 : vector<32x128xbf16> to vector<32x128xf32>
    %175 = vector.extract_strided_slice %126 {offsets = [0, 5], sizes = [32, 1], strides = [1, 1]} : vector<64x16xf32> to vector<32x1xf32>
    %176 = vector.broadcast %175 : vector<32x1xf32> to vector<32x128xf32>
    %177 = arith.mulf %176, %174 : vector<32x128xf32>
    %178 = arith.addf %158, %177 : vector<32x128xf32>
    %179 = vector.extract_strided_slice %126 {offsets = [32, 5], sizes = [32, 1], strides = [1, 1]} : vector<64x16xf32> to vector<32x1xf32>
    %180 = vector.broadcast %179 : vector<32x1xf32> to vector<32x128xf32>
    %181 = arith.mulf %180, %174 : vector<32x128xf32>
    %182 = arith.addf %162, %181 : vector<32x128xf32>
    %c192 = arith.constant 192 : index
    %c0_75 = arith.constant 0 : index
    %183 = vector.load %arg9[%c192, %c0_75] : memref<512x128xbf16, #tpu.memory_space<vmem>>, vector<32x128xbf16>
    %184 = arith.extf %183 : vector<32x128xbf16> to vector<32x128xf32>
    %185 = vector.extract_strided_slice %126 {offsets = [0, 6], sizes = [32, 1], strides = [1, 1]} : vector<64x16xf32> to vector<32x1xf32>
    %186 = vector.broadcast %185 : vector<32x1xf32> to vector<32x128xf32>
    %187 = arith.mulf %186, %184 : vector<32x128xf32>
    %188 = arith.addf %168, %187 : vector<32x128xf32>
    %189 = vector.extract_strided_slice %126 {offsets = [32, 6], sizes = [32, 1], strides = [1, 1]} : vector<64x16xf32> to vector<32x1xf32>
    %190 = vector.broadcast %189 : vector<32x1xf32> to vector<32x128xf32>
    %191 = arith.mulf %190, %184 : vector<32x128xf32>
    %192 = arith.addf %172, %191 : vector<32x128xf32>
    %c224 = arith.constant 224 : index
    %c0_76 = arith.constant 0 : index
    %193 = vector.load %arg9[%c224, %c0_76] : memref<512x128xbf16, #tpu.memory_space<vmem>>, vector<32x128xbf16>
    %194 = arith.extf %193 : vector<32x128xbf16> to vector<32x128xf32>
    %195 = vector.extract_strided_slice %126 {offsets = [0, 7], sizes = [32, 1], strides = [1, 1]} : vector<64x16xf32> to vector<32x1xf32>
    %196 = vector.broadcast %195 : vector<32x1xf32> to vector<32x128xf32>
    %197 = arith.mulf %196, %194 : vector<32x128xf32>
    %198 = arith.addf %178, %197 : vector<32x128xf32>
    %199 = vector.extract_strided_slice %126 {offsets = [32, 7], sizes = [32, 1], strides = [1, 1]} : vector<64x16xf32> to vector<32x1xf32>
    %200 = vector.broadcast %199 : vector<32x1xf32> to vector<32x128xf32>
    %201 = arith.mulf %200, %194 : vector<32x128xf32>
    %202 = arith.addf %182, %201 : vector<32x128xf32>
    %c256 = arith.constant 256 : index
    %c0_77 = arith.constant 0 : index
    %203 = vector.load %arg9[%c256, %c0_77] : memref<512x128xbf16, #tpu.memory_space<vmem>>, vector<32x128xbf16>
    %204 = arith.extf %203 : vector<32x128xbf16> to vector<32x128xf32>
    %205 = vector.extract_strided_slice %126 {offsets = [0, 8], sizes = [32, 1], strides = [1, 1]} : vector<64x16xf32> to vector<32x1xf32>
    %206 = vector.broadcast %205 : vector<32x1xf32> to vector<32x128xf32>
    %207 = arith.mulf %206, %204 : vector<32x128xf32>
    %208 = arith.addf %188, %207 : vector<32x128xf32>
    %209 = vector.extract_strided_slice %126 {offsets = [32, 8], sizes = [32, 1], strides = [1, 1]} : vector<64x16xf32> to vector<32x1xf32>
    %210 = vector.broadcast %209 : vector<32x1xf32> to vector<32x128xf32>
    %211 = arith.mulf %210, %204 : vector<32x128xf32>
    %212 = arith.addf %192, %211 : vector<32x128xf32>
    %c288 = arith.constant 288 : index
    %c0_78 = arith.constant 0 : index
    %213 = vector.load %arg9[%c288, %c0_78] : memref<512x128xbf16, #tpu.memory_space<vmem>>, vector<32x128xbf16>
    %214 = arith.extf %213 : vector<32x128xbf16> to vector<32x128xf32>
    %215 = vector.extract_strided_slice %126 {offsets = [0, 9], sizes = [32, 1], strides = [1, 1]} : vector<64x16xf32> to vector<32x1xf32>
    %216 = vector.broadcast %215 : vector<32x1xf32> to vector<32x128xf32>
    %217 = arith.mulf %216, %214 : vector<32x128xf32>
    %218 = arith.addf %198, %217 : vector<32x128xf32>
    %219 = vector.extract_strided_slice %126 {offsets = [32, 9], sizes = [32, 1], strides = [1, 1]} : vector<64x16xf32> to vector<32x1xf32>
    %220 = vector.broadcast %219 : vector<32x1xf32> to vector<32x128xf32>
    %221 = arith.mulf %220, %214 : vector<32x128xf32>
    %222 = arith.addf %202, %221 : vector<32x128xf32>
    %c320 = arith.constant 320 : index
    %c0_79 = arith.constant 0 : index
    %223 = vector.load %arg9[%c320, %c0_79] : memref<512x128xbf16, #tpu.memory_space<vmem>>, vector<32x128xbf16>
    %224 = arith.extf %223 : vector<32x128xbf16> to vector<32x128xf32>
    %225 = vector.extract_strided_slice %126 {offsets = [0, 10], sizes = [32, 1], strides = [1, 1]} : vector<64x16xf32> to vector<32x1xf32>
    %226 = vector.broadcast %225 : vector<32x1xf32> to vector<32x128xf32>
    %227 = arith.mulf %226, %224 : vector<32x128xf32>
    %228 = arith.addf %208, %227 : vector<32x128xf32>
    %229 = vector.extract_strided_slice %126 {offsets = [32, 10], sizes = [32, 1], strides = [1, 1]} : vector<64x16xf32> to vector<32x1xf32>
    %230 = vector.broadcast %229 : vector<32x1xf32> to vector<32x128xf32>
    %231 = arith.mulf %230, %224 : vector<32x128xf32>
    %232 = arith.addf %212, %231 : vector<32x128xf32>
    %c352 = arith.constant 352 : index
    %c0_80 = arith.constant 0 : index
    %233 = vector.load %arg9[%c352, %c0_80] : memref<512x128xbf16, #tpu.memory_space<vmem>>, vector<32x128xbf16>
    %234 = arith.extf %233 : vector<32x128xbf16> to vector<32x128xf32>
    %235 = vector.extract_strided_slice %126 {offsets = [0, 11], sizes = [32, 1], strides = [1, 1]} : vector<64x16xf32> to vector<32x1xf32>
    %236 = vector.broadcast %235 : vector<32x1xf32> to vector<32x128xf32>
    %237 = arith.mulf %236, %234 : vector<32x128xf32>
    %238 = arith.addf %218, %237 : vector<32x128xf32>
    %239 = vector.extract_strided_slice %126 {offsets = [32, 11], sizes = [32, 1], strides = [1, 1]} : vector<64x16xf32> to vector<32x1xf32>
    %240 = vector.broadcast %239 : vector<32x1xf32> to vector<32x128xf32>
    %241 = arith.mulf %240, %234 : vector<32x128xf32>
    %242 = arith.addf %222, %241 : vector<32x128xf32>
    %c384 = arith.constant 384 : index
    %c0_81 = arith.constant 0 : index
    %243 = vector.load %arg9[%c384, %c0_81] : memref<512x128xbf16, #tpu.memory_space<vmem>>, vector<32x128xbf16>
    %244 = arith.extf %243 : vector<32x128xbf16> to vector<32x128xf32>
    %245 = vector.extract_strided_slice %126 {offsets = [0, 12], sizes = [32, 1], strides = [1, 1]} : vector<64x16xf32> to vector<32x1xf32>
    %246 = vector.broadcast %245 : vector<32x1xf32> to vector<32x128xf32>
    %247 = arith.mulf %246, %244 : vector<32x128xf32>
    %248 = arith.addf %228, %247 : vector<32x128xf32>
    %249 = vector.extract_strided_slice %126 {offsets = [32, 12], sizes = [32, 1], strides = [1, 1]} : vector<64x16xf32> to vector<32x1xf32>
    %250 = vector.broadcast %249 : vector<32x1xf32> to vector<32x128xf32>
    %251 = arith.mulf %250, %244 : vector<32x128xf32>
    %252 = arith.addf %232, %251 : vector<32x128xf32>
    %c416 = arith.constant 416 : index
    %c0_82 = arith.constant 0 : index
    %253 = vector.load %arg9[%c416, %c0_82] : memref<512x128xbf16, #tpu.memory_space<vmem>>, vector<32x128xbf16>
    %254 = arith.extf %253 : vector<32x128xbf16> to vector<32x128xf32>
    %255 = vector.extract_strided_slice %126 {offsets = [0, 13], sizes = [32, 1], strides = [1, 1]} : vector<64x16xf32> to vector<32x1xf32>
    %256 = vector.broadcast %255 : vector<32x1xf32> to vector<32x128xf32>
    %257 = arith.mulf %256, %254 : vector<32x128xf32>
    %258 = arith.addf %238, %257 : vector<32x128xf32>
    %259 = vector.extract_strided_slice %126 {offsets = [32, 13], sizes = [32, 1], strides = [1, 1]} : vector<64x16xf32> to vector<32x1xf32>
    %260 = vector.broadcast %259 : vector<32x1xf32> to vector<32x128xf32>
    %261 = arith.mulf %260, %254 : vector<32x128xf32>
    %262 = arith.addf %242, %261 : vector<32x128xf32>
    %c448 = arith.constant 448 : index
    %c0_83 = arith.constant 0 : index
    %263 = vector.load %arg9[%c448, %c0_83] : memref<512x128xbf16, #tpu.memory_space<vmem>>, vector<32x128xbf16>
    %264 = arith.extf %263 : vector<32x128xbf16> to vector<32x128xf32>
    %265 = vector.extract_strided_slice %126 {offsets = [0, 14], sizes = [32, 1], strides = [1, 1]} : vector<64x16xf32> to vector<32x1xf32>
    %266 = vector.broadcast %265 : vector<32x1xf32> to vector<32x128xf32>
    %267 = arith.mulf %266, %264 : vector<32x128xf32>
    %268 = arith.addf %248, %267 : vector<32x128xf32>
    %269 = vector.extract_strided_slice %126 {offsets = [32, 14], sizes = [32, 1], strides = [1, 1]} : vector<64x16xf32> to vector<32x1xf32>
    %270 = vector.broadcast %269 : vector<32x1xf32> to vector<32x128xf32>
    %271 = arith.mulf %270, %264 : vector<32x128xf32>
    %272 = arith.addf %252, %271 : vector<32x128xf32>
    %c480 = arith.constant 480 : index
    %c0_84 = arith.constant 0 : index
    %273 = vector.load %arg9[%c480, %c0_84] : memref<512x128xbf16, #tpu.memory_space<vmem>>, vector<32x128xbf16>
    %274 = arith.extf %273 : vector<32x128xbf16> to vector<32x128xf32>
    %275 = vector.extract_strided_slice %126 {offsets = [0, 15], sizes = [32, 1], strides = [1, 1]} : vector<64x16xf32> to vector<32x1xf32>
    %276 = vector.broadcast %275 : vector<32x1xf32> to vector<32x128xf32>
    %277 = arith.mulf %276, %274 : vector<32x128xf32>
    %278 = arith.addf %258, %277 : vector<32x128xf32>
    %279 = vector.extract_strided_slice %126 {offsets = [32, 15], sizes = [32, 1], strides = [1, 1]} : vector<64x16xf32> to vector<32x1xf32>
    %280 = vector.broadcast %279 : vector<32x1xf32> to vector<32x128xf32>
    %281 = arith.mulf %280, %274 : vector<32x128xf32>
    %282 = arith.addf %262, %281 : vector<32x128xf32>
    %283 = arith.addf %268, %278 : vector<32x128xf32>
    %cst_85 = arith.constant dense<0.000000e+00> : vector<128xf32>
    %284 = vector.multi_reduction <add>, %283, %cst_85 [0] : vector<32x128xf32> to vector<128xf32>
    %285 = vector.shape_cast %284 : vector<128xf32> to vector<1x128xf32>
    %286 = arith.addf %285, %3 : vector<1x128xf32>
    %cst_86 = arith.constant 0.000000e+00 : f32
    %287 = vector.broadcast %cst_86 : f32 to vector<1x128xf32>
    %288 = arith.maximumf %286, %287 : vector<1x128xf32>
    %289 = arith.mulf %288, %4 : vector<1x128xf32>
    %cst_87 = arith.constant dense<0.000000e+00> : vector<1xf32>
    %290 = vector.multi_reduction <add>, %289, %cst_87 [1] : vector<1x128xf32> to vector<1xf32>
    %291 = vector.shape_cast %290 : vector<1xf32> to vector<1x1xf32>
    %292 = arith.addf %291, %5 : vector<1x1xf32>
    %c0_88 = arith.constant 0 : index
    %c0_89 = arith.constant 0 : index
    %293 = vector.load %arg7[%c0_88, %c0_89] : memref<2x1xf32, #tpu.memory_space<vmem>>, vector<1x1xf32>
    tpu.vector_store %arg7[%c0_88, %c0_89], %292 {strides = array<i32>} : memref<2x1xf32, #tpu.memory_space<vmem>>, vector<1x1xf32>,
    %294 = arith.addf %272, %282 : vector<32x128xf32>
    %cst_90 = arith.constant dense<0.000000e+00> : vector<128xf32>
    %295 = vector.multi_reduction <add>, %294, %cst_90 [0] : vector<32x128xf32> to vector<128xf32>
    %296 = vector.shape_cast %295 : vector<128xf32> to vector<1x128xf32>
    %297 = arith.addf %296, %3 : vector<1x128xf32>
    %cst_91 = arith.constant 0.000000e+00 : f32
    %298 = vector.broadcast %cst_91 : f32 to vector<1x128xf32>
    %299 = arith.maximumf %297, %298 : vector<1x128xf32>
    %300 = arith.mulf %299, %4 : vector<1x128xf32>
    %cst_92 = arith.constant dense<0.000000e+00> : vector<1xf32>
    %301 = vector.multi_reduction <add>, %300, %cst_92 [1] : vector<1x128xf32> to vector<1xf32>
    %302 = vector.shape_cast %301 : vector<1xf32> to vector<1x1xf32>
    %303 = arith.addf %302, %5 : vector<1x1xf32>
    %c1_93 = arith.constant 1 : index
    %c0_94 = arith.constant 0 : index
    %304 = vector.load %arg7[%c1_93, %c0_94] : memref<2x1xf32, #tpu.memory_space<vmem>>, vector<1x1xf32>
    tpu.vector_store %arg7[%c1_93, %c0_94], %303 {strides = array<i32>} : memref<2x1xf32, #tpu.memory_space<vmem>>, vector<1x1xf32>,
    return
  }
}

</mosaic_0001>

<llo_original>
// kernel: forward.1
$region0: #{forward.1}
  #allocation0 [shape = 'u32[]', space=smem, size = 0x4, offset = 0x4, fixed_abs, tag = 'smem constant byte address 0x4 - core index']
  #allocation1 [shape = 'u32[144,128]{1,0:T(1,128)}', space=vmem, size = 0x12000, scoped, tag = 'internal scratch']
  #allocation2 [shape = 'f32[8,128]{1,0:T(8,128)}', space=vmem, size = 0x1000, scoped, tag = 'scratch operand']
  #allocation3 [shape = 'bf16[512,128]{1,0:T(8,128)(2,1)}', space=vmem, size = 0x20000, scoped, tag = 'scratch operand']
  #allocation4 [shape = 's32[1]{0}', space=sflag, size = 0x4, scoped, tag = 'scratch operand']
  #allocation9 [shape = 's32[]', space=sflag, size = 0x4, offset = 0, fixed_abs, tag = 'sflag constant byte address 0x0 - dummy sync flag']
  #allocation10 [shape = 's32[]', space=sflag, size = 0x4, offset = 0, fixed_abs, tag = 'sflag constant byte address 0x0 - dummy sync flag']
  #allocation11 [shape = 'u32[]', space=smem, size = 0x4, offset = 0x44, fixed_abs, tag = 'smem constant byte address 0x44 - assertion arg 0']
  #allocation12 [shape = 'u32[]', space=smem, size = 0x4, offset = 0x48, fixed_abs, tag = 'smem constant byte address 0x48 - assertion arg 1']
  %s0 = inlined_call_operand.vmem [shape: f32[2], index: 0, kind: input, shape index: {}]
  %s1 = inlined_call_operand.vmem [shape: f32[2,16], index: 1, kind: input, shape index: {}]
  %s2 = inlined_call_operand.vmem [shape: f32[64,8], index: 2, kind: input, shape index: {}]
  %s3 = inlined_call_operand.vmem [shape: f32[128,128], index: 3, kind: input, shape index: {}]
  %s4 = inlined_call_operand.vmem [shape: f32[128,16], index: 4, kind: input, shape index: {}]
  %s5 = inlined_call_operand.hbm [shape: bf16[512,128], index: 5, kind: input, shape index: {}]
  %s6 = inlined_call_operand.vmem [shape: f32[16,128], index: 6, kind: input, shape index: {}]
  %s7 = inlined_call_operand.vmem [shape: f32[2,1], index: 7, kind: output, shape index: {}]
  %s8 = sld [smem:[#allocation0]]
  $region46: #{forward.1} parent=0
    _
  %s10 = ssub.s32 1, %s8
  %s11 = scalar_select 0, %s10, %s8
  $region1: #{forward.1} parent=0
    #allocation5 [shape = 'u8[512]{0}', space=smem, size = 0x200, scoped, tag = 'input window, operand 0, single buffered']
    #allocation6 [shape = 's32[1]{0}', space=sflag, size = 0x4, scoped, tag = 'scoped memory for forward.1']
    #allocation7 [shape = 'u8[1024]{0}', space=smem, size = 0x400, scoped, tag = 'input window, operand 1, single buffered']
    #allocation8 [shape = 's32[1]{0}', space=sflag, size = 0x4, scoped, tag = 'scoped memory for forward.1']
    %12 = vsyncpa [#allocation6], 0
    %13 = vsyncpa [#allocation8], 0
    // Predicated region
    $region2: #{forward.1} parent=1 // pred_check
      _
    $region3: #{forward.1} parent=1 // pred_check_branch
      %15 = sbr.rel (0) target = $region5
    $region4: #{forward.1} parent=1 // pred_region
      %s17 = ssub.s32 16, 16
      %18 = vsyncadd [#allocation6], %s17
      %s20 = sshll.u32 %s0, 4
      %s21 = int_to_ptr.vmem [resolvable:$true] %s20
      %23 = dma.vmem_to_smem %s21, 16, [#allocation5], [#allocation6]
    $region5: #{forward.1} parent=1 // pred_fallthru
      _
    // Predicated region
    $region6: #{forward.1} parent=1 // pred_check
      _
    $region7: #{forward.1} parent=1 // pred_check_branch
      %25 = sbr.rel (0) target = $region9
    $region8: #{forward.1} parent=1 // pred_region
      %s27 = ssub.s32 32, 32
      %28 = vsyncadd [#allocation8], %s27
      %s30 = sshll.u32 %s1, 4
      %s31 = int_to_ptr.vmem [resolvable:$true] %s30
      %33 = dma.vmem_to_smem %s31, 32, [#allocation7], [#allocation8]
    $region9: #{forward.1} parent=1 // pred_fallthru
      _
    // Predicated region
    $region10: #{forward.1} parent=1 // pred_check
      _
    $region11: #{forward.1} parent=1 // pred_check_branch
      %35 = sbr.rel (0) target = $region13
    $region12: #{forward.1} parent=1 // pred_region
      _
    $region13: #{forward.1} parent=1 // pred_fallthru
      _
    // Predicated region
    $region14: #{forward.1} parent=1 // pred_check
      _
    $region15: #{forward.1} parent=1 // pred_check_branch
      %37 = sbr.rel (0) target = $region17
    $region16: #{forward.1} parent=1 // pred_region
      _
    $region17: #{forward.1} parent=1 // pred_fallthru
      _
    // Predicated region
    $region18: #{forward.1} parent=1 // pred_check
      _
    $region19: #{forward.1} parent=1 // pred_check_branch
      %39 = sbr.rel (0) target = $region21
    $region20: #{forward.1} parent=1 // pred_region
      _
    $region21: #{forward.1} parent=1 // pred_fallthru
      _
    // Predicated region
    $region22: #{forward.1} parent=1 // pred_check
      _
    $region23: #{forward.1} parent=1 // pred_check_branch
      %41 = sbr.rel (0) target = $region25
    $region24: #{forward.1} parent=1 // pred_region
      _
    $region25: #{forward.1} parent=1 // pred_fallthru
      _
    // Predicated region
    $region26: #{forward.1} parent=1 // pred_check
      _
    $region27: #{forward.1} parent=1 // pred_check_branch
      %43 = sbr.rel (0) target = $region29
    $region28: #{forward.1} parent=1 // pred_region
      %44 = dma.done [#allocation6], 16
    $region29: #{forward.1} parent=1 // pred_fallthru
      _
    // Predicated region
    $region30: #{forward.1} parent=1 // pred_check
      _
    $region31: #{forward.1} parent=1 // pred_check_branch
      %46 = sbr.rel (0) target = $region33
    $region32: #{forward.1} parent=1 // pred_region
      %47 = dma.done [#allocation8], 32
    $region33: #{forward.1} parent=1 // pred_fallthru
      _
    %48 = sfence
    // Predicated region
    $region34: #{forward.1} parent=1 // pred_check
      _
    $region35: #{forward.1} parent=1 // pred_check_branch
      %50 = sbr.rel target = $region37
    $region36: #{forward.1} parent=1 // pred_region
      %51 = sst [smem:[#allocation11]] [#allocation10]
      %52 = sst [smem:[#allocation12]] [#allocation9]
    $region37: #{forward.1} parent=1 // pred_fallthru
      _
    %54 = shalt.err (0)
    %s56 = sshll.u32 [#allocation3], 4
    %s57 = int_to_ptr.vmem [resolvable:$true] %s56
    %59 = dma.hbm_to_vmem [thread:$0]  %s5, 4096, %s57, [#allocation4]
    %v60 = vld [vmem:[%s6] sm:$0xff]
    %v61 = vld [vmem:[%s6 + $0x8] sm:$0xff]
    %s62 = sld [smem:[#allocation7]]
    %v63 = vstv %s62
    %v64 = vmul.f32 %v63, %v61
    %s65 = sld [smem:[#allocation7 + $0x4]]
    %v66 = vstv %s65
    %v67 = vmul.f32 %v66, %v61
    %v69 = vrot.slane %v67, 1
    %v71 = vadd.f32 %v64, %v69
    %s72 = sld [smem:[#allocation7 + $0x8]]
    %v73 = vstv %s72
    %v74 = vmul.f32 %v73, %v61
    %v76 = vrot.slane %v74, 2
    %v78 = vadd.f32 %v71, %v76
    %79 = vst [vmem:[#allocation2] sm:$0x1] %v78
    %s80 = sld [smem:[#allocation7 + $0x1]]
    %v81 = vstv %s80
    %v82 = vmul.f32 %v81, %v61
    %s83 = sld [smem:[#allocation7 + $0x5]]
    %v84 = vstv %s83
    %v85 = vmul.f32 %v84, %v61
    %v87 = vrot.slane %v85, 1
    %v89 = vadd.f32 %v82, %v87
    %s90 = sld [smem:[#allocation7 + $0x9]]
    %v91 = vstv %s90
    %v92 = vmul.f32 %v91, %v61
    %v94 = vrot.slane %v92, 2
    %v96 = vadd.f32 %v89, %v94
    %97 = vst [vmem:[#allocation2 + $0x1] sm:$0x1] %v96
    %s98 = sld [smem:[#allocation7 + $0x2]]
    %v99 = vstv %s98
    %v100 = vmul.f32 %v99, %v61
    %s101 = sld [smem:[#allocation7 + $0x6]]
    %v102 = vstv %s101
    %v103 = vmul.f32 %v102, %v61
    %v105 = vrot.slane %v103, 1
    %v107 = vadd.f32 %v100, %v105
    %s108 = sld [smem:[#allocation7 + $0xa]]
    %v109 = vstv %s108
    %v110 = vmul.f32 %v109, %v61
    %v112 = vrot.slane %v110, 2
    %v114 = vadd.f32 %v107, %v112
    %115 = vst [vmem:[#allocation2 + $0x2] sm:$0x1] %v114
    %s116 = sld [smem:[#allocation5]]
    %v117 = vstv %s116
    %v118 = vmul.f32 %v117, %v60
    %v120 = vrot.slane %v118, 2
    %v122 = vadd.f32 %v60, %v120
    %s123 = sld [smem:[#allocation7 + $0x3]]
    %v124 = vstv %s123
    %v125 = vmul.f32 %v124, %v61
    %v126 = vadd.f32 %v122, %v125
    %s127 = sld [smem:[#allocation7 + $0x7]]
    %v128 = vstv %s127
    %v129 = vmul.f32 %v128, %v61
    %v131 = vrot.slane %v129, 1
    %v133 = vadd.f32 %v126, %v131
    %s134 = sld [smem:[#allocation7 + $0xb]]
    %v135 = vstv %s134
    %v136 = vmul.f32 %v135, %v61
    %v138 = vrot.slane %v136, 2
    %v140 = vadd.f32 %v133, %v138
    %141 = vst [vmem:[#allocation2 + $0x3] sm:$0x1] %v140
    %s142 = sld [smem:[#allocation7 + $0x80]]
    %v143 = vstv %s142
    %v144 = vmul.f32 %v143, %v61
    %s145 = sld [smem:[#allocation7 + $0x84]]
    %v146 = vstv %s145
    %v147 = vmul.f32 %v146, %v61
    %v149 = vrot.slane %v147, 1
    %v151 = vadd.f32 %v144, %v149
    %s152 = sld [smem:[#allocation7 + $0x88]]
    %v153 = vstv %s152
    %v154 = vmul.f32 %v153, %v61
    %v156 = vrot.slane %v154, 2
    %v158 = vadd.f32 %v151, %v156
    %159 = vst [vmem:[#allocation2 + $0x4] sm:$0x1] %v158
    %s160 = sld [smem:[#allocation7 + $0x81]]
    %v161 = vstv %s160
    %v162 = vmul.f32 %v161, %v61
    %s163 = sld [smem:[#allocation7 + $0x85]]
    %v164 = vstv %s163
    %v165 = vmul.f32 %v164, %v61
    %v167 = vrot.slane %v165, 1
    %v169 = vadd.f32 %v162, %v167
    %s170 = sld [smem:[#allocation7 + $0x89]]
    %v171 = vstv %s170
    %v172 = vmul.f32 %v171, %v61
    %v174 = vrot.slane %v172, 2
    %v176 = vadd.f32 %v169, %v174
    %177 = vst [vmem:[#allocation2 + $0x5] sm:$0x1] %v176
    %s178 = sld [smem:[#allocation7 + $0x82]]
    %v179 = vstv %s178
    %v180 = vmul.f32 %v179, %v61
    %s181 = sld [smem:[#allocation7 + $0x86]]
    %v182 = vstv %s181
    %v183 = vmul.f32 %v182, %v61
    %v185 = vrot.slane %v183, 1
    %v187 = vadd.f32 %v180, %v185
    %s188 = sld [smem:[#allocation7 + $0x8a]]
    %v189 = vstv %s188
    %v190 = vmul.f32 %v189, %v61
    %v192 = vrot.slane %v190, 2
    %v194 = vadd.f32 %v187, %v192
    %195 = vst [vmem:[#allocation2 + $0x6] sm:$0x1] %v194
    %s196 = sld [smem:[#allocation5 + $0x1]]
    %v197 = vstv %s196
    %v198 = vmul.f32 %v197, %v60
    %v200 = vrot.slane %v198, 2
    %v202 = vadd.f32 %v60, %v200
    %s203 = sld [smem:[#allocation7 + $0x83]]
    %v204 = vstv %s203
    %v205 = vmul.f32 %v204, %v61
    %v206 = vadd.f32 %v202, %v205
    %s207 = sld [smem:[#allocation7 + $0x87]]
    %v208 = vstv %s207
    %v209 = vmul.f32 %v208, %v61
    %v211 = vrot.slane %v209, 1
    %v213 = vadd.f32 %v206, %v211
    %s214 = sld [smem:[#allocation7 + $0x8b]]
    %v215 = vstv %s214
    %v216 = vmul.f32 %v215, %v61
    %v218 = vrot.slane %v216, 2
    %v220 = vadd.f32 %v213, %v218
    %221 = vst [vmem:[#allocation2 + $0x7] sm:$0x1] %v220
    %v222 = vld [vmem:[%s2] sm:$0xff]
    %v223 = vld [vmem:[%s2 + $0x8] sm:$0xff]
    %v224 = vld [vmem:[%s2 + $0x10] sm:$0xff]
    %v225 = vld [vmem:[%s2 + $0x18] sm:$0xff]
    %v226 = vld [vmem:[%s2 + $0x20] sm:$0xff]
    %v227 = vld [vmem:[%s2 + $0x28] sm:$0xff]
    %v228 = vld [vmem:[%s2 + $0x30] sm:$0xff]
    %v229 = vld [vmem:[%s2 + $0x38] sm:$0xff]
    %v230 = vld [vmem:[#allocation2] sm:$0xff]
    %vm231 = vcmask 64512
    %v233 = vsel %vm231, %v222, 0
    %v236 = vsel %vm231, %v223, 0
    %v239 = vsel %vm231, %v224, 0
    %v242 = vsel %vm231, %v225, 0
    %v245 = vsel %vm231, %v226, 0
    %v248 = vsel %vm231, %v227, 0
    %v251 = vsel %vm231, %v228, 0
    %v254 = vsel %vm231, %v229, 0
    %256 = vmatprep.subr.mxu0 0.0
    %257 = vmatpush1.msra.mxu0 0.0
    %258 = vmatprep.subr.mxu0 0.0
    %259 = vmatpush1.msra.mxu0 0.0
    %260 = vmatprep.subr.mxu0 0.0
    %261 = vmatpush1.msra.mxu0 0.0
    %262 = vmatprep.subr.mxu0 0.0
    %263 = vmatpush1.msra.mxu0 0.0
    %264 = vmatprep.subr.mxu0 0.0
    %265 = vmatpush1.msra.mxu0 0.0
    %266 = vmatprep.subr.mxu0 0.0
    %267 = vmatpush1.msra.mxu0 0.0
    %268 = vmatprep.subr.mxu0 0.0
    %269 = vmatpush1.msra.mxu0 0.0
    %270 = vmatprep.subr.mxu0 0.0
    %271 = vmatpush1.msra.mxu0 0.0
    %272 = vmatprep.subr.mxu0 0.0
    %273 = vmatpush1.msra.mxu0 0.0
    %274 = vmatprep.subr.mxu0 0.0
    %275 = vmatpush1.msra.mxu0 0.0
    %276 = vmatprep.subr.mxu0 0.0
    %277 = vmatpush1.msra.mxu0 0.0
    %278 = vmatprep.subr.mxu0 0.0
    %279 = vmatpush1.msra.mxu0 0.0
    %280 = vmatprep.subr.mxu0 0.0
    %281 = vmatpush1.msra.mxu0 0.0
    %282 = vmatprep.subr.mxu0 0.0
    %283 = vmatpush1.msra.mxu0 0.0
    %284 = vmatprep.subr.mxu0 0.0
    %285 = vmatpush1.msra.mxu0 0.0
    %286 = vmatprep.subr.mxu0 0.0
    %287 = vmatpush1.msra.mxu0 %v230
    %288 = vmatprep.subr.mxu0 0.0
    %289 = vmatpush2.msra.mxu0 0.0
    %290 = vmatprep.subr.mxu0 0.0
    %291 = vmatpush2.msra.mxu0 0.0
    %292 = vmatprep.subr.mxu0 0.0
    %293 = vmatpush2.msra.mxu0 0.0
    %294 = vmatprep.subr.mxu0 0.0
    %295 = vmatpush2.msra.mxu0 0.0
    %296 = vmatprep.subr.mxu0 0.0
    %297 = vmatpush2.msra.mxu0 0.0
    %298 = vmatprep.subr.mxu0 0.0
    %299 = vmatpush2.msra.mxu0 0.0
    %300 = vmatprep.subr.mxu0 0.0
    %301 = vmatpush2.msra.mxu0 0.0
    %302 = vmatprep.subr.mxu0 0.0
    %303 = vmatpush2.msra.mxu0 0.0
    %304 = vmatprep.subr.mxu0 0.0
    %305 = vmatpush2.msra.mxu0 0.0
    %306 = vmatprep.subr.mxu0 0.0
    %307 = vmatpush2.msra.mxu0 0.0
    %308 = vmatprep.subr.mxu0 0.0
    %309 = vmatpush2.msra.mxu0 0.0
    %310 = vmatprep.subr.mxu0 0.0
    %311 = vmatpush2.msra.mxu0 0.0
    %312 = vmatprep.subr.mxu0 0.0
    %313 = vmatpush2.msra.mxu0 0.0
    %314 = vmatprep.subr.mxu0 0.0
    %315 = vmatpush2.msra.mxu0 0.0
    %316 = vmatprep.subr.mxu0 0.0
    %317 = vmatpush2.msra.mxu0 0.0
    %318 = vmatprep.subr.mxu0 0.0
    %319 = vmatpush2.msra.mxu0 0.0
    %320 = vmatprep.mubr.f32.mxu0 0.0
    %321 = vmatmul.mubr.f32.gmra.mxu0 %v233
    %v322 = vpop.f32.mrf.mxu0
    %v323 = vadd.f32 0.0, %v322
    %v324 = vpop.f32.mrf.mxu0
    %325 = vmatprep.mubr.f32.mxu0 0.0
    %326 = vmatmul.mubr.f32.gmra.mxu0 %v236
    %v327 = vpop.f32.mrf.mxu0
    %v328 = vadd.f32 0.0, %v327
    %v329 = vpop.f32.mrf.mxu0
    %330 = vmatprep.mubr.f32.mxu0 0.0
    %331 = vmatmul.mubr.f32.gmra.mxu0 %v239
    %v332 = vpop.f32.mrf.mxu0
    %v333 = vadd.f32 0.0, %v332
    %v334 = vpop.f32.mrf.mxu0
    %335 = vmatprep.mubr.f32.mxu0 0.0
    %336 = vmatmul.mubr.f32.gmra.mxu0 %v242
    %v337 = vpop.f32.mrf.mxu0
    %v338 = vadd.f32 0.0, %v337
    %v339 = vpop.f32.mrf.mxu0
    %340 = vmatprep.mubr.f32.mxu0 0.0
    %341 = vmatmul.mubr.f32.gmra.mxu0 %v245
    %v342 = vpop.f32.mrf.mxu0
    %v343 = vadd.f32 0.0, %v342
    %v344 = vpop.f32.mrf.mxu0
    %345 = vmatprep.mubr.f32.mxu0 0.0
    %346 = vmatmul.mubr.f32.gmra.mxu0 %v248
    %v347 = vpop.f32.mrf.mxu0
    %v348 = vadd.f32 0.0, %v347
    %v349 = vpop.f32.mrf.mxu0
    %350 = vmatprep.mubr.f32.mxu0 0.0
    %351 = vmatmul.mubr.f32.gmra.mxu0 %v251
    %v352 = vpop.f32.mrf.mxu0
    %v353 = vadd.f32 0.0, %v352
    %v354 = vpop.f32.mrf.mxu0
    %355 = vmatprep.mubr.f32.mxu0 0.0
    %356 = vmatmul.mubr.f32.gmra.mxu0 %v254
    %v357 = vpop.f32.mrf.mxu0
    %v358 = vadd.f32 0.0, %v357
    %v359 = vpop.f32.mrf.mxu0
    %360 = vdwg.mxu0
    %v361 = vmax.f32 %v323, 0.0
    %v362 = vmax.f32 %v328, 0.0
    %v363 = vmax.f32 %v333, 0.0
    %v364 = vmax.f32 %v338, 0.0
    %v365 = vmax.f32 %v343, 0.0
    %v366 = vmax.f32 %v348, 0.0
    %v367 = vmax.f32 %v353, 0.0
    %v368 = vmax.f32 %v358, 0.0
    %v369 = vld [vmem:[%s3] sm:$0xff]
    %v370 = vld [vmem:[%s3 + $0x8] sm:$0xff]
    %v371 = vld [vmem:[%s3 + $0x10] sm:$0xff]
    %v372 = vld [vmem:[%s3 + $0x18] sm:$0xff]
    %v373 = vld [vmem:[%s3 + $0x20] sm:$0xff]
    %v374 = vld [vmem:[%s3 + $0x28] sm:$0xff]
    %v375 = vld [vmem:[%s3 + $0x30] sm:$0xff]
    %v376 = vld [vmem:[%s3 + $0x38] sm:$0xff]
    %v377 = vld [vmem:[%s3 + $0x40] sm:$0xff]
    %v378 = vld [vmem:[%s3 + $0x48] sm:$0xff]
    %v379 = vld [vmem:[%s3 + $0x50] sm:$0xff]
    %v380 = vld [vmem:[%s3 + $0x58] sm:$0xff]
    %v381 = vld [vmem:[%s3 + $0x60] sm:$0xff]
    %v382 = vld [vmem:[%s3 + $0x68] sm:$0xff]
    %v383 = vld [vmem:[%s3 + $0x70] sm:$0xff]
    %v384 = vld [vmem:[%s3 + $0x78] sm:$0xff]
    %385 = vmatprep.subr.mxu0 0.0
    %386 = vmatpush1.msra.mxu0 %v384
    %387 = vmatprep.subr.mxu0 0.0
    %388 = vmatpush1.msra.mxu0 %v383
    %389 = vmatprep.subr.mxu0 0.0
    %390 = vmatpush1.msra.mxu0 %v382
    %391 = vmatprep.subr.mxu0 0.0
    %392 = vmatpush1.msra.mxu0 %v381
    %393 = vmatprep.subr.mxu0 0.0
    %394 = vmatpush1.msra.mxu0 %v380
    %395 = vmatprep.subr.mxu0 0.0
    %396 = vmatpush1.msra.mxu0 %v379
    %397 = vmatprep.subr.mxu0 0.0
    %398 = vmatpush1.msra.mxu0 %v378
    %399 = vmatprep.subr.mxu0 0.0
    %400 = vmatpush1.msra.mxu0 %v377
    %401 = vmatprep.subr.mxu0 0.0
    %402 = vmatpush1.msra.mxu0 %v376
    %403 = vmatprep.subr.mxu0 0.0
    %404 = vmatpush1.msra.mxu0 %v375
    %405 = vmatprep.subr.mxu0 0.0
    %406 = vmatpush1.msra.mxu0 %v374
    %407 = vmatprep.subr.mxu0 0.0
    %408 = vmatpush1.msra.mxu0 %v373
    %409 = vmatprep.subr.mxu0 0.0
    %410 = vmatpush1.msra.mxu0 %v372
    %411 = vmatprep.subr.mxu0 0.0
    %412 = vmatpush1.msra.mxu0 %v371
    %413 = vmatprep.subr.mxu0 0.0
    %414 = vmatpush1.msra.mxu0 %v370
    %415 = vmatprep.subr.mxu0 0.0
    %416 = vmatpush1.msra.mxu0 %v369
    %417 = vmatprep.subr.mxu0 0.0
    %418 = vmatpush2.msra.mxu0 0.0
    %419 = vmatprep.subr.mxu0 0.0
    %420 = vmatpush2.msra.mxu0 0.0
    %421 = vmatprep.subr.mxu0 0.0
    %422 = vmatpush2.msra.mxu0 0.0
    %423 = vmatprep.subr.mxu0 0.0
    %424 = vmatpush2.msra.mxu0 0.0
    %425 = vmatprep.subr.mxu0 0.0
    %426 = vmatpush2.msra.mxu0 0.0
    %427 = vmatprep.subr.mxu0 0.0
    %428 = vmatpush2.msra.mxu0 0.0
    %429 = vmatprep.subr.mxu0 0.0
    %430 = vmatpush2.msra.mxu0 0.0
    %431 = vmatprep.subr.mxu0 0.0
    %432 = vmatpush2.msra.mxu0 0.0
    %433 = vmatprep.subr.mxu0 0.0
    %434 = vmatpush2.msra.mxu0 0.0
    %435 = vmatprep.subr.mxu0 0.0
    %436 = vmatpush2.msra.mxu0 0.0
    %437 = vmatprep.subr.mxu0 0.0
    %438 = vmatpush2.msra.mxu0 0.0
    %439 = vmatprep.subr.mxu0 0.0
    %440 = vmatpush2.msra.mxu0 0.0
    %441 = vmatprep.subr.mxu0 0.0
    %442 = vmatpush2.msra.mxu0 0.0
    %443 = vmatprep.subr.mxu0 0.0
    %444 = vmatpush2.msra.mxu0 0.0
    %445 = vmatprep.subr.mxu0 0.0
    %446 = vmatpush2.msra.mxu0 0.0
    %447 = vmatprep.subr.mxu0 0.0
    %448 = vmatpush2.msra.mxu0 0.0
    %449 = vmatprep.mubr.f32.mxu0 0.0
    %450 = vmatmul.mubr.f32.gmra.mxu0 %v361
    %v451 = vpop.f32.mrf.mxu0
    %v452 = vadd.f32 0.0, %v451
    %v453 = vpop.f32.mrf.mxu0
    %454 = vmatprep.mubr.f32.mxu0 0.0
    %455 = vmatmul.mubr.f32.gmra.mxu0 %v362
    %v456 = vpop.f32.mrf.mxu0
    %v457 = vadd.f32 0.0, %v456
    %v458 = vpop.f32.mrf.mxu0
    %459 = vmatprep.mubr.f32.mxu0 0.0
    %460 = vmatmul.mubr.f32.gmra.mxu0 %v363
    %v461 = vpop.f32.mrf.mxu0
    %v462 = vadd.f32 0.0, %v461
    %v463 = vpop.f32.mrf.mxu0
    %464 = vmatprep.mubr.f32.mxu0 0.0
    %465 = vmatmul.mubr.f32.gmra.mxu0 %v364
    %v466 = vpop.f32.mrf.mxu0
    %v467 = vadd.f32 0.0, %v466
    %v468 = vpop.f32.mrf.mxu0
    %469 = vmatprep.mubr.f32.mxu0 0.0
    %470 = vmatmul.mubr.f32.gmra.mxu0 %v365
    %v471 = vpop.f32.mrf.mxu0
    %v472 = vadd.f32 0.0, %v471
    %v473 = vpop.f32.mrf.mxu0
    %474 = vmatprep.mubr.f32.mxu0 0.0
    %475 = vmatmul.mubr.f32.gmra.mxu0 %v366
    %v476 = vpop.f32.mrf.mxu0
    %v477 = vadd.f32 0.0, %v476
    %v478 = vpop.f32.mrf.mxu0
    %479 = vmatprep.mubr.f32.mxu0 0.0
    %480 = vmatmul.mubr.f32.gmra.mxu0 %v367
    %v481 = vpop.f32.mrf.mxu0
    %v482 = vadd.f32 0.0, %v481
    %v483 = vpop.f32.mrf.mxu0
    %484 = vmatprep.mubr.f32.mxu0 0.0
    %485 = vmatmul.mubr.f32.gmra.mxu0 %v368
    %v486 = vpop.f32.mrf.mxu0
    %v487 = vadd.f32 0.0, %v486
    %v488 = vpop.f32.mrf.mxu0
    %489 = vdwg.mxu0
    %v490 = vadd.f32 %v323, %v452
    %v491 = vadd.f32 %v328, %v457
    %v492 = vadd.f32 %v333, %v462
    %v493 = vadd.f32 %v338, %v467
    %v494 = vadd.f32 %v343, %v472
    %v495 = vadd.f32 %v348, %v477
    %v496 = vadd.f32 %v353, %v482
    %v497 = vadd.f32 %v358, %v487
    %v498 = vmax.f32 %v490, 0.0
    %v499 = vmax.f32 %v491, 0.0
    %v500 = vmax.f32 %v492, 0.0
    %v501 = vmax.f32 %v493, 0.0
    %v502 = vmax.f32 %v494, 0.0
    %v503 = vmax.f32 %v495, 0.0
    %v504 = vmax.f32 %v496, 0.0
    %v505 = vmax.f32 %v497, 0.0
    %v506 = vld [vmem:[%s4] sm:$0xff]
    %v507 = vld [vmem:[%s4 + $0x8] sm:$0xff]
    %v508 = vld [vmem:[%s4 + $0x10] sm:$0xff]
    %v509 = vld [vmem:[%s4 + $0x18] sm:$0xff]
    %v510 = vld [vmem:[%s4 + $0x20] sm:$0xff]
    %v511 = vld [vmem:[%s4 + $0x28] sm:$0xff]
    %v512 = vld [vmem:[%s4 + $0x30] sm:$0xff]
    %v513 = vld [vmem:[%s4 + $0x38] sm:$0xff]
    %v514 = vld [vmem:[%s4 + $0x40] sm:$0xff]
    %v515 = vld [vmem:[%s4 + $0x48] sm:$0xff]
    %v516 = vld [vmem:[%s4 + $0x50] sm:$0xff]
    %v517 = vld [vmem:[%s4 + $0x58] sm:$0xff]
    %v518 = vld [vmem:[%s4 + $0x60] sm:$0xff]
    %v519 = vld [vmem:[%s4 + $0x68] sm:$0xff]
    %v520 = vld [vmem:[%s4 + $0x70] sm:$0xff]
    %v521 = vld [vmem:[%s4 + $0x78] sm:$0xff]
    %522 = vmatprep.subr.mxu0 0.0
    %523 = vmatpush1.msra.mxu0 %v521
    %524 = vmatprep.subr.mxu0 0.0
    %525 = vmatpush1.msra.mxu0 %v520
    %526 = vmatprep.subr.mxu0 0.0
    %527 = vmatpush1.msra.mxu0 %v519
    %528 = vmatprep.subr.mxu0 0.0
    %529 = vmatpush1.msra.mxu0 %v518
    %530 = vmatprep.subr.mxu0 0.0
    %531 = vmatpush1.msra.mxu0 %v517
    %532 = vmatprep.subr.mxu0 0.0
    %533 = vmatpush1.msra.mxu0 %v516
    %534 = vmatprep.subr.mxu0 0.0
    %535 = vmatpush1.msra.mxu0 %v515
    %536 = vmatprep.subr.mxu0 0.0
    %537 = vmatpush1.msra.mxu0 %v514
    %538 = vmatprep.subr.mxu0 0.0
    %539 = vmatpush1.msra.mxu0 %v513
    %540 = vmatprep.subr.mxu0 0.0
    %541 = vmatpush1.msra.mxu0 %v512
    %542 = vmatprep.subr.mxu0 0.0
    %543 = vmatpush1.msra.mxu0 %v511
    %544 = vmatprep.subr.mxu0 0.0
    %545 = vmatpush1.msra.mxu0 %v510
    %546 = vmatprep.subr.mxu0 0.0
    %547 = vmatpush1.msra.mxu0 %v509
    %548 = vmatprep.subr.mxu0 0.0
    %549 = vmatpush1.msra.mxu0 %v508
    %550 = vmatprep.subr.mxu0 0.0
    %551 = vmatpush1.msra.mxu0 %v507
    %552 = vmatprep.subr.mxu0 0.0
    %553 = vmatpush1.msra.mxu0 %v506
    %554 = vmatprep.subr.mxu0 0.0
    %555 = vmatpush2.msra.mxu0 0.0
    %556 = vmatprep.subr.mxu0 0.0
    %557 = vmatpush2.msra.mxu0 0.0
    %558 = vmatprep.subr.mxu0 0.0
    %559 = vmatpush2.msra.mxu0 0.0
    %560 = vmatprep.subr.mxu0 0.0
    %561 = vmatpush2.msra.mxu0 0.0
    %562 = vmatprep.subr.mxu0 0.0
    %563 = vmatpush2.msra.mxu0 0.0
    %564 = vmatprep.subr.mxu0 0.0
    %565 = vmatpush2.msra.mxu0 0.0
    %566 = vmatprep.subr.mxu0 0.0
    %567 = vmatpush2.msra.mxu0 0.0
    %568 = vmatprep.subr.mxu0 0.0
    %569 = vmatpush2.msra.mxu0 0.0
    %570 = vmatprep.subr.mxu0 0.0
    %571 = vmatpush2.msra.mxu0 0.0
    %572 = vmatprep.subr.mxu0 0.0
    %573 = vmatpush2.msra.mxu0 0.0
    %574 = vmatprep.subr.mxu0 0.0
    %575 = vmatpush2.msra.mxu0 0.0
    %576 = vmatprep.subr.mxu0 0.0
    %577 = vmatpush2.msra.mxu0 0.0
    %578 = vmatprep.subr.mxu0 0.0
    %579 = vmatpush2.msra.mxu0 0.0
    %580 = vmatprep.subr.mxu0 0.0
    %581 = vmatpush2.msra.mxu0 0.0
    %582 = vmatprep.subr.mxu0 0.0
    %583 = vmatpush2.msra.mxu0 0.0
    %584 = vmatprep.subr.mxu0 0.0
    %585 = vmatpush2.msra.mxu0 0.0
    %586 = vmatprep.mubr.f32.mxu0 0.0
    %587 = vmatmul.mubr.f32.gmra.mxu0 %v498
    %v588 = vpop.f32.mrf.mxu0
    %v589 = vadd.f32 0.0, %v588
    %v590 = vpop.f32.mrf.mxu0
    %591 = vmatprep.mubr.f32.mxu0 0.0
    %592 = vmatmul.mubr.f32.gmra.mxu0 %v499
    %v593 = vpop.f32.mrf.mxu0
    %v594 = vadd.f32 0.0, %v593
    %v595 = vpop.f32.mrf.mxu0
    %596 = vmatprep.mubr.f32.mxu0 0.0
    %597 = vmatmul.mubr.f32.gmra.mxu0 %v500
    %v598 = vpop.f32.mrf.mxu0
    %v599 = vadd.f32 0.0, %v598
    %v600 = vpop.f32.mrf.mxu0
    %601 = vmatprep.mubr.f32.mxu0 0.0
    %602 = vmatmul.mubr.f32.gmra.mxu0 %v501
    %v603 = vpop.f32.mrf.mxu0
    %v604 = vadd.f32 0.0, %v603
    %v605 = vpop.f32.mrf.mxu0
    %606 = vmatprep.mubr.f32.mxu0 0.0
    %607 = vmatmul.mubr.f32.gmra.mxu0 %v502
    %v608 = vpop.f32.mrf.mxu0
    %v609 = vadd.f32 0.0, %v608
    %v610 = vpop.f32.mrf.mxu0
    %611 = vmatprep.mubr.f32.mxu0 0.0
    %612 = vmatmul.mubr.f32.gmra.mxu0 %v503
    %v613 = vpop.f32.mrf.mxu0
    %v614 = vadd.f32 0.0, %v613
    %v615 = vpop.f32.mrf.mxu0
    %616 = vmatprep.mubr.f32.mxu0 0.0
    %617 = vmatmul.mubr.f32.gmra.mxu0 %v504
    %v618 = vpop.f32.mrf.mxu0
    %v619 = vadd.f32 0.0, %v618
    %v620 = vpop.f32.mrf.mxu0
    %621 = vmatprep.mubr.f32.mxu0 0.0
    %622 = vmatmul.mubr.f32.gmra.mxu0 %v505
    %v623 = vpop.f32.mrf.mxu0
    %v624 = vadd.f32 0.0, %v623
    %v625 = vpop.f32.mrf.mxu0
    %626 = vdwg.mxu0
    %s627 = smul.u32 4, 64
    %s628 = smul.u32 %s627, 1
    %s629 = sshll.u32 %s628, 4
    %630 = dma.done [#allocation4], %s629
    %v631 = vld [vmem:[#allocation3] sm:$0xf]
    %v632 = vld [vmem:[#allocation3 + $0x4] sm:$0xf]
    %v633 = vld [vmem:[#allocation3 + $0x8] sm:$0xf]
    %v634 = vld [vmem:[#allocation3 + $0xc] sm:$0xf]
    %v635 = vunpack.c.l.bf16 %v631
    %v636 = vunpack.c.l.bf16 %v632
    %v637 = vunpack.c.l.bf16 %v633
    %v638 = vunpack.c.l.bf16 %v634
    %640 = vset.pattern.permute.xlu0 0
    %641 = vperm.xlu0 %640, %v589
    %v642 = vpop.permute.xlu0 %641
    %645 = vset.pattern.permute.xlu0 0
    %646 = vperm.xlu0 %645, %v594
    %v647 = vpop.permute.xlu0 %646
    %650 = vset.pattern.permute.xlu0 0
    %651 = vperm.xlu0 %650, %v599
    %v652 = vpop.permute.xlu0 %651
    %655 = vset.pattern.permute.xlu0 0
    %656 = vperm.xlu0 %655, %v604
    %v657 = vpop.permute.xlu0 %656
    %v659 = vmul.f32 %v642, %v635
    %v660 = vmul.f32 %v647, %v636
    %v661 = vmul.f32 %v652, %v637
    %v662 = vmul.f32 %v657, %v638
    %664 = vset.pattern.permute.xlu0 0
    %665 = vperm.xlu0 %664, %v609
    %v666 = vpop.permute.xlu0 %665
    %669 = vset.pattern.permute.xlu0 0
    %670 = vperm.xlu0 %669, %v614
    %v671 = vpop.permute.xlu0 %670
    %674 = vset.pattern.permute.xlu0 0
    %675 = vperm.xlu0 %674, %v619
    %v676 = vpop.permute.xlu0 %675
    %679 = vset.pattern.permute.xlu0 0
    %680 = vperm.xlu0 %679, %v624
    %v681 = vpop.permute.xlu0 %680
    %v683 = vmul.f32 %v666, %v635
    %v684 = vmul.f32 %v671, %v636
    %v685 = vmul.f32 %v676, %v637
    %v686 = vmul.f32 %v681, %v638
    %v687 = vld [vmem:[#allocation3 + $0x10] sm:$0xf]
    %v688 = vld [vmem:[#allocation3 + $0x14] sm:$0xf]
    %v689 = vld [vmem:[#allocation3 + $0x18] sm:$0xf]
    %v690 = vld [vmem:[#allocation3 + $0x1c] sm:$0xf]
    %v691 = vunpack.c.l.bf16 %v687
    %v692 = vunpack.c.l.bf16 %v688
    %v693 = vunpack.c.l.bf16 %v689
    %v694 = vunpack.c.l.bf16 %v690
    %695 = vset.pattern.permute.xlu0 1
    %696 = vperm.xlu0 %695, %v589
    %v697 = vpop.permute.xlu0 %696
    %699 = vset.pattern.permute.xlu0 1
    %700 = vperm.xlu0 %699, %v594
    %v701 = vpop.permute.xlu0 %700
    %703 = vset.pattern.permute.xlu0 1
    %704 = vperm.xlu0 %703, %v599
    %v705 = vpop.permute.xlu0 %704
    %707 = vset.pattern.permute.xlu0 1
    %708 = vperm.xlu0 %707, %v604
    %v709 = vpop.permute.xlu0 %708
    %v711 = vmul.f32 %v697, %v691
    %v712 = vmul.f32 %v701, %v692
    %v713 = vmul.f32 %v705, %v693
    %v714 = vmul.f32 %v709, %v694
    %715 = vset.pattern.permute.xlu0 1
    %716 = vperm.xlu0 %715, %v609
    %v717 = vpop.permute.xlu0 %716
    %719 = vset.pattern.permute.xlu0 1
    %720 = vperm.xlu0 %719, %v614
    %v721 = vpop.permute.xlu0 %720
    %723 = vset.pattern.permute.xlu0 1
    %724 = vperm.xlu0 %723, %v619
    %v725 = vpop.permute.xlu0 %724
    %727 = vset.pattern.permute.xlu0 1
    %728 = vperm.xlu0 %727, %v624
    %v729 = vpop.permute.xlu0 %728
    %v731 = vmul.f32 %v717, %v691
    %v732 = vmul.f32 %v721, %v692
    %v733 = vmul.f32 %v725, %v693
    %v734 = vmul.f32 %v729, %v694
    %v735 = vld [vmem:[#allocation3 + $0x20] sm:$0xf]
    %v736 = vld [vmem:[#allocation3 + $0x24] sm:$0xf]
    %v737 = vld [vmem:[#allocation3 + $0x28] sm:$0xf]
    %v738 = vld [vmem:[#allocation3 + $0x2c] sm:$0xf]
    %v739 = vunpack.c.l.bf16 %v735
    %v740 = vunpack.c.l.bf16 %v736
    %v741 = vunpack.c.l.bf16 %v737
    %v742 = vunpack.c.l.bf16 %v738
    %743 = vset.pattern.permute.xlu0 2
    %744 = vperm.xlu0 %743, %v589
    %v745 = vpop.permute.xlu0 %744
    %747 = vset.pattern.permute.xlu0 2
    %748 = vperm.xlu0 %747, %v594
    %v749 = vpop.permute.xlu0 %748
    %751 = vset.pattern.permute.xlu0 2
    %752 = vperm.xlu0 %751, %v599
    %v753 = vpop.permute.xlu0 %752
    %755 = vset.pattern.permute.xlu0 2
    %756 = vperm.xlu0 %755, %v604
    %v757 = vpop.permute.xlu0 %756
    %v759 = vmul.f32 %v745, %v739
    %v760 = vmul.f32 %v749, %v740
    %v761 = vmul.f32 %v753, %v741
    %v762 = vmul.f32 %v757, %v742
    %v763 = vadd.f32 %v659, %v759
    %v764 = vadd.f32 %v660, %v760
    %v765 = vadd.f32 %v661, %v761
    %v766 = vadd.f32 %v662, %v762
    %767 = vset.pattern.permute.xlu0 2
    %768 = vperm.xlu0 %767, %v609
    %v769 = vpop.permute.xlu0 %768
    %771 = vset.pattern.permute.xlu0 2
    %772 = vperm.xlu0 %771, %v614
    %v773 = vpop.permute.xlu0 %772
    %775 = vset.pattern.permute.xlu0 2
    %776 = vperm.xlu0 %775, %v619
    %v777 = vpop.permute.xlu0 %776
    %779 = vset.pattern.permute.xlu0 2
    %780 = vperm.xlu0 %779, %v624
    %v781 = vpop.permute.xlu0 %780
    %v783 = vmul.f32 %v769, %v739
    %v784 = vmul.f32 %v773, %v740
    %v785 = vmul.f32 %v777, %v741
    %v786 = vmul.f32 %v781, %v742
    %v787 = vadd.f32 %v683, %v783
    %v788 = vadd.f32 %v684, %v784
    %v789 = vadd.f32 %v685, %v785
    %v790 = vadd.f32 %v686, %v786
    %v791 = vld [vmem:[#allocation3 + $0x30] sm:$0xf]
    %v792 = vld [vmem:[#allocation3 + $0x34] sm:$0xf]
    %v793 = vld [vmem:[#allocation3 + $0x38] sm:$0xf]
    %v794 = vld [vmem:[#allocation3 + $0x3c] sm:$0xf]
    %v795 = vunpack.c.l.bf16 %v791
    %v796 = vunpack.c.l.bf16 %v792
    %v797 = vunpack.c.l.bf16 %v793
    %v798 = vunpack.c.l.bf16 %v794
    %799 = vset.pattern.permute.xlu0 3
    %800 = vperm.xlu0 %799, %v589
    %v801 = vpop.permute.xlu0 %800
    %803 = vset.pattern.permute.xlu0 3
    %804 = vperm.xlu0 %803, %v594
    %v805 = vpop.permute.xlu0 %804
    %807 = vset.pattern.permute.xlu0 3
    %808 = vperm.xlu0 %807, %v599
    %v809 = vpop.permute.xlu0 %808
    %811 = vset.pattern.permute.xlu0 3
    %812 = vperm.xlu0 %811, %v604
    %v813 = vpop.permute.xlu0 %812
    %v815 = vmul.f32 %v801, %v795
    %v816 = vmul.f32 %v805, %v796
    %v817 = vmul.f32 %v809, %v797
    %v818 = vmul.f32 %v813, %v798
    %v819 = vadd.f32 %v711, %v815
    %v820 = vadd.f32 %v712, %v816
    %v821 = vadd.f32 %v713, %v817
    %v822 = vadd.f32 %v714, %v818
    %823 = vset.pattern.permute.xlu0 3
    %824 = vperm.xlu0 %823, %v609
    %v825 = vpop.permute.xlu0 %824
    %827 = vset.pattern.permute.xlu0 3
    %828 = vperm.xlu0 %827, %v614
    %v829 = vpop.permute.xlu0 %828
    %831 = vset.pattern.permute.xlu0 3
    %832 = vperm.xlu0 %831, %v619
    %v833 = vpop.permute.xlu0 %832
    %835 = vset.pattern.permute.xlu0 3
    %836 = vperm.xlu0 %835, %v624
    %v837 = vpop.permute.xlu0 %836
    %v839 = vmul.f32 %v825, %v795
    %v840 = vmul.f32 %v829, %v796
    %v841 = vmul.f32 %v833, %v797
    %v842 = vmul.f32 %v837, %v798
    %v843 = vadd.f32 %v731, %v839
    %v844 = vadd.f32 %v732, %v840
    %v845 = vadd.f32 %v733, %v841
    %v846 = vadd.f32 %v734, %v842
    %v847 = vld [vmem:[#allocation3 + $0x40] sm:$0xf]
    %v848 = vld [vmem:[#allocation3 + $0x44] sm:$0xf]
    %v849 = vld [vmem:[#allocation3 + $0x48] sm:$0xf]
    %v850 = vld [vmem:[#allocation3 + $0x4c] sm:$0xf]
    %v851 = vunpack.c.l.bf16 %v847
    %v852 = vunpack.c.l.bf16 %v848
    %v853 = vunpack.c.l.bf16 %v849
    %v854 = vunpack.c.l.bf16 %v850
    %855 = vset.pattern.permute.xlu0 4
    %856 = vperm.xlu0 %855, %v589
    %v857 = vpop.permute.xlu0 %856
    %859 = vset.pattern.permute.xlu0 4
    %860 = vperm.xlu0 %859, %v594
    %v861 = vpop.permute.xlu0 %860
    %863 = vset.pattern.permute.xlu0 4
    %864 = vperm.xlu0 %863, %v599
    %v865 = vpop.permute.xlu0 %864
    %867 = vset.pattern.permute.xlu0 4
    %868 = vperm.xlu0 %867, %v604
    %v869 = vpop.permute.xlu0 %868
    %v871 = vmul.f32 %v857, %v851
    %v872 = vmul.f32 %v861, %v852
    %v873 = vmul.f32 %v865, %v853
    %v874 = vmul.f32 %v869, %v854
    %v875 = vadd.f32 %v763, %v871
    %v876 = vadd.f32 %v764, %v872
    %v877 = vadd.f32 %v765, %v873
    %v878 = vadd.f32 %v766, %v874
    %879 = vset.pattern.permute.xlu0 4
    %880 = vperm.xlu0 %879, %v609
    %v881 = vpop.permute.xlu0 %880
    %883 = vset.pattern.permute.xlu0 4
    %884 = vperm.xlu0 %883, %v614
    %v885 = vpop.permute.xlu0 %884
    %887 = vset.pattern.permute.xlu0 4
    %888 = vperm.xlu0 %887, %v619
    %v889 = vpop.permute.xlu0 %888
    %891 = vset.pattern.permute.xlu0 4
    %892 = vperm.xlu0 %891, %v624
    %v893 = vpop.permute.xlu0 %892
    %v895 = vmul.f32 %v881, %v851
    %v896 = vmul.f32 %v885, %v852
    %v897 = vmul.f32 %v889, %v853
    %v898 = vmul.f32 %v893, %v854
    %v899 = vadd.f32 %v787, %v895
    %v900 = vadd.f32 %v788, %v896
    %v901 = vadd.f32 %v789, %v897
    %v902 = vadd.f32 %v790, %v898
    %v903 = vld [vmem:[#allocation3 + $0x50] sm:$0xf]
    %v904 = vld [vmem:[#allocation3 + $0x54] sm:$0xf]
    %v905 = vld [vmem:[#allocation3 + $0x58] sm:$0xf]
    %v906 = vld [vmem:[#allocation3 + $0x5c] sm:$0xf]
    %v907 = vunpack.c.l.bf16 %v903
    %v908 = vunpack.c.l.bf16 %v904
    %v909 = vunpack.c.l.bf16 %v905
    %v910 = vunpack.c.l.bf16 %v906
    %911 = vset.pattern.permute.xlu0 5
    %912 = vperm.xlu0 %911, %v589
    %v913 = vpop.permute.xlu0 %912
    %915 = vset.pattern.permute.xlu0 5
    %916 = vperm.xlu0 %915, %v594
    %v917 = vpop.permute.xlu0 %916
    %919 = vset.pattern.permute.xlu0 5
    %920 = vperm.xlu0 %919, %v599
    %v921 = vpop.permute.xlu0 %920
    %923 = vset.pattern.permute.xlu0 5
    %924 = vperm.xlu0 %923, %v604
    %v925 = vpop.permute.xlu0 %924
    %v927 = vmul.f32 %v913, %v907
    %v928 = vmul.f32 %v917, %v908
    %v929 = vmul.f32 %v921, %v909
    %v930 = vmul.f32 %v925, %v910
    %v931 = vadd.f32 %v819, %v927
    %v932 = vadd.f32 %v820, %v928
    %v933 = vadd.f32 %v821, %v929
    %v934 = vadd.f32 %v822, %v930
    %935 = vset.pattern.permute.xlu0 5
    %936 = vperm.xlu0 %935, %v609
    %v937 = vpop.permute.xlu0 %936
    %939 = vset.pattern.permute.xlu0 5
    %940 = vperm.xlu0 %939, %v614
    %v941 = vpop.permute.xlu0 %940
    %943 = vset.pattern.permute.xlu0 5
    %944 = vperm.xlu0 %943, %v619
    %v945 = vpop.permute.xlu0 %944
    %947 = vset.pattern.permute.xlu0 5
    %948 = vperm.xlu0 %947, %v624
    %v949 = vpop.permute.xlu0 %948
    %v951 = vmul.f32 %v937, %v907
    %v952 = vmul.f32 %v941, %v908
    %v953 = vmul.f32 %v945, %v909
    %v954 = vmul.f32 %v949, %v910
    %v955 = vadd.f32 %v843, %v951
    %v956 = vadd.f32 %v844, %v952
    %v957 = vadd.f32 %v845, %v953
    %v958 = vadd.f32 %v846, %v954
    %v959 = vld [vmem:[#allocation3 + $0x60] sm:$0xf]
    %v960 = vld [vmem:[#allocation3 + $0x64] sm:$0xf]
    %v961 = vld [vmem:[#allocation3 + $0x68] sm:$0xf]
    %v962 = vld [vmem:[#allocation3 + $0x6c] sm:$0xf]
    %v963 = vunpack.c.l.bf16 %v959
    %v964 = vunpack.c.l.bf16 %v960
    %v965 = vunpack.c.l.bf16 %v961
    %v966 = vunpack.c.l.bf16 %v962
    %967 = vset.pattern.permute.xlu0 6
    %968 = vperm.xlu0 %967, %v589
    %v969 = vpop.permute.xlu0 %968
    %971 = vset.pattern.permute.xlu0 6
    %972 = vperm.xlu0 %971, %v594
    %v973 = vpop.permute.xlu0 %972
    %975 = vset.pattern.permute.xlu0 6
    %976 = vperm.xlu0 %975, %v599
    %v977 = vpop.permute.xlu0 %976
    %979 = vset.pattern.permute.xlu0 6
    %980 = vperm.xlu0 %979, %v604
    %v981 = vpop.permute.xlu0 %980
    %v983 = vmul.f32 %v969, %v963
    %v984 = vmul.f32 %v973, %v964
    %v985 = vmul.f32 %v977, %v965
    %v986 = vmul.f32 %v981, %v966
    %v987 = vadd.f32 %v875, %v983
    %v988 = vadd.f32 %v876, %v984
    %v989 = vadd.f32 %v877, %v985
    %v990 = vadd.f32 %v878, %v986
    %991 = vset.pattern.permute.xlu0 6
    %992 = vperm.xlu0 %991, %v609
    %v993 = vpop.permute.xlu0 %992
    %995 = vset.pattern.permute.xlu0 6
    %996 = vperm.xlu0 %995, %v614
    %v997 = vpop.permute.xlu0 %996
    %999 = vset.pattern.permute.xlu0 6
    %1000 = vperm.xlu0 %999, %v619
    %v1001 = vpop.permute.xlu0 %1000
    %1003 = vset.pattern.permute.xlu0 6
    %1004 = vperm.xlu0 %1003, %v624
    %v1005 = vpop.permute.xlu0 %1004
    %v1007 = vmul.f32 %v993, %v963
    %v1008 = vmul.f32 %v997, %v964
    %v1009 = vmul.f32 %v1001, %v965
    %v1010 = vmul.f32 %v1005, %v966
    %v1011 = vadd.f32 %v899, %v1007
    %v1012 = vadd.f32 %v900, %v1008
    %v1013 = vadd.f32 %v901, %v1009
    %v1014 = vadd.f32 %v902, %v1010
    %v1015 = vld [vmem:[#allocation3 + $0x70] sm:$0xf]
    %v1016 = vld [vmem:[#allocation3 + $0x74] sm:$0xf]
    %v1017 = vld [vmem:[#allocation3 + $0x78] sm:$0xf]
    %v1018 = vld [vmem:[#allocation3 + $0x7c] sm:$0xf]
    %v1019 = vunpack.c.l.bf16 %v1015
    %v1020 = vunpack.c.l.bf16 %v1016
    %v1021 = vunpack.c.l.bf16 %v1017
    %v1022 = vunpack.c.l.bf16 %v1018
    %1023 = vset.pattern.permute.xlu0 7
    %1024 = vperm.xlu0 %1023, %v589
    %v1025 = vpop.permute.xlu0 %1024
    %1027 = vset.pattern.permute.xlu0 7
    %1028 = vperm.xlu0 %1027, %v594
    %v1029 = vpop.permute.xlu0 %1028
    %1031 = vset.pattern.permute.xlu0 7
    %1032 = vperm.xlu0 %1031, %v599
    %v1033 = vpop.permute.xlu0 %1032
    %1035 = vset.pattern.permute.xlu0 7
    %1036 = vperm.xlu0 %1035, %v604
    %v1037 = vpop.permute.xlu0 %1036
    %v1039 = vmul.f32 %v1025, %v1019
    %v1040 = vmul.f32 %v1029, %v1020
    %v1041 = vmul.f32 %v1033, %v1021
    %v1042 = vmul.f32 %v1037, %v1022
    %v1043 = vadd.f32 %v931, %v1039
    %v1044 = vadd.f32 %v932, %v1040
    %v1045 = vadd.f32 %v933, %v1041
    %v1046 = vadd.f32 %v934, %v1042
    %1047 = vset.pattern.permute.xlu0 7
    %1048 = vperm.xlu0 %1047, %v609
    %v1049 = vpop.permute.xlu0 %1048
    %1051 = vset.pattern.permute.xlu0 7
    %1052 = vperm.xlu0 %1051, %v614
    %v1053 = vpop.permute.xlu0 %1052
    %1055 = vset.pattern.permute.xlu0 7
    %1056 = vperm.xlu0 %1055, %v619
    %v1057 = vpop.permute.xlu0 %1056
    %1059 = vset.pattern.permute.xlu0 7
    %1060 = vperm.xlu0 %1059, %v624
    %v1061 = vpop.permute.xlu0 %1060
    %v1063 = vmul.f32 %v1049, %v1019
    %v1064 = vmul.f32 %v1053, %v1020
    %v1065 = vmul.f32 %v1057, %v1021
    %v1066 = vmul.f32 %v1061, %v1022
    %v1067 = vadd.f32 %v955, %v1063
    %v1068 = vadd.f32 %v956, %v1064
    %v1069 = vadd.f32 %v957, %v1065
    %v1070 = vadd.f32 %v958, %v1066
    %v1071 = vld [vmem:[#allocation3 + $0x80] sm:$0xf]
    %v1072 = vld [vmem:[#allocation3 + $0x84] sm:$0xf]
    %v1073 = vld [vmem:[#allocation3 + $0x88] sm:$0xf]
    %v1074 = vld [vmem:[#allocation3 + $0x8c] sm:$0xf]
    %v1075 = vunpack.c.l.bf16 %v1071
    %v1076 = vunpack.c.l.bf16 %v1072
    %v1077 = vunpack.c.l.bf16 %v1073
    %v1078 = vunpack.c.l.bf16 %v1074
    %1079 = vset.pattern.permute.xlu0 8
    %1080 = vperm.xlu0 %1079, %v589
    %v1081 = vpop.permute.xlu0 %1080
    %1083 = vset.pattern.permute.xlu0 8
    %1084 = vperm.xlu0 %1083, %v594
    %v1085 = vpop.permute.xlu0 %1084
    %1087 = vset.pattern.permute.xlu0 8
    %1088 = vperm.xlu0 %1087, %v599
    %v1089 = vpop.permute.xlu0 %1088
    %1091 = vset.pattern.permute.xlu0 8
    %1092 = vperm.xlu0 %1091, %v604
    %v1093 = vpop.permute.xlu0 %1092
    %v1095 = vmul.f32 %v1081, %v1075
    %v1096 = vmul.f32 %v1085, %v1076
    %v1097 = vmul.f32 %v1089, %v1077
    %v1098 = vmul.f32 %v1093, %v1078
    %v1099 = vadd.f32 %v987, %v1095
    %v1100 = vadd.f32 %v988, %v1096
    %v1101 = vadd.f32 %v989, %v1097
    %v1102 = vadd.f32 %v990, %v1098
    %1103 = vset.pattern.permute.xlu0 8
    %1104 = vperm.xlu0 %1103, %v609
    %v1105 = vpop.permute.xlu0 %1104
    %1107 = vset.pattern.permute.xlu0 8
    %1108 = vperm.xlu0 %1107, %v614
    %v1109 = vpop.permute.xlu0 %1108
    %1111 = vset.pattern.permute.xlu0 8
    %1112 = vperm.xlu0 %1111, %v619
    %v1113 = vpop.permute.xlu0 %1112
    %1115 = vset.pattern.permute.xlu0 8
    %1116 = vperm.xlu0 %1115, %v624
    %v1117 = vpop.permute.xlu0 %1116
    %v1119 = vmul.f32 %v1105, %v1075
    %v1120 = vmul.f32 %v1109, %v1076
    %v1121 = vmul.f32 %v1113, %v1077
    %v1122 = vmul.f32 %v1117, %v1078
    %v1123 = vadd.f32 %v1011, %v1119
    %v1124 = vadd.f32 %v1012, %v1120
    %v1125 = vadd.f32 %v1013, %v1121
    %v1126 = vadd.f32 %v1014, %v1122
    %v1127 = vld [vmem:[#allocation3 + $0x90] sm:$0xf]
    %v1128 = vld [vmem:[#allocation3 + $0x94] sm:$0xf]
    %v1129 = vld [vmem:[#allocation3 + $0x98] sm:$0xf]
    %v1130 = vld [vmem:[#allocation3 + $0x9c] sm:$0xf]
    %v1131 = vunpack.c.l.bf16 %v1127
    %v1132 = vunpack.c.l.bf16 %v1128
    %v1133 = vunpack.c.l.bf16 %v1129
    %v1134 = vunpack.c.l.bf16 %v1130
    %1135 = vset.pattern.permute.xlu0 9
    %1136 = vperm.xlu0 %1135, %v589
    %v1137 = vpop.permute.xlu0 %1136
    %1139 = vset.pattern.permute.xlu0 9
    %1140 = vperm.xlu0 %1139, %v594
    %v1141 = vpop.permute.xlu0 %1140
    %1143 = vset.pattern.permute.xlu0 9
    %1144 = vperm.xlu0 %1143, %v599
    %v1145 = vpop.permute.xlu0 %1144
    %1147 = vset.pattern.permute.xlu0 9
    %1148 = vperm.xlu0 %1147, %v604
    %v1149 = vpop.permute.xlu0 %1148
    %v1151 = vmul.f32 %v1137, %v1131
    %v1152 = vmul.f32 %v1141, %v1132
    %v1153 = vmul.f32 %v1145, %v1133
    %v1154 = vmul.f32 %v1149, %v1134
    %v1155 = vadd.f32 %v1043, %v1151
    %v1156 = vadd.f32 %v1044, %v1152
    %v1157 = vadd.f32 %v1045, %v1153
    %v1158 = vadd.f32 %v1046, %v1154
    %1159 = vset.pattern.permute.xlu0 9
    %1160 = vperm.xlu0 %1159, %v609
    %v1161 = vpop.permute.xlu0 %1160
    %1163 = vset.pattern.permute.xlu0 9
    %1164 = vperm.xlu0 %1163, %v614
    %v1165 = vpop.permute.xlu0 %1164
    %1167 = vset.pattern.permute.xlu0 9
    %1168 = vperm.xlu0 %1167, %v619
    %v1169 = vpop.permute.xlu0 %1168
    %1171 = vset.pattern.permute.xlu0 9
    %1172 = vperm.xlu0 %1171, %v624
    %v1173 = vpop.permute.xlu0 %1172
    %v1175 = vmul.f32 %v1161, %v1131
    %v1176 = vmul.f32 %v1165, %v1132
    %v1177 = vmul.f32 %v1169, %v1133
    %v1178 = vmul.f32 %v1173, %v1134
    %v1179 = vadd.f32 %v1067, %v1175
    %v1180 = vadd.f32 %v1068, %v1176
    %v1181 = vadd.f32 %v1069, %v1177
    %v1182 = vadd.f32 %v1070, %v1178
    %v1183 = vld [vmem:[#allocation3 + $0xa0] sm:$0xf]
    %v1184 = vld [vmem:[#allocation3 + $0xa4] sm:$0xf]
    %v1185 = vld [vmem:[#allocation3 + $0xa8] sm:$0xf]
    %v1186 = vld [vmem:[#allocation3 + $0xac] sm:$0xf]
    %v1187 = vunpack.c.l.bf16 %v1183
    %v1188 = vunpack.c.l.bf16 %v1184
    %v1189 = vunpack.c.l.bf16 %v1185
    %v1190 = vunpack.c.l.bf16 %v1186
    %1191 = vset.pattern.permute.xlu0 10
    %1192 = vperm.xlu0 %1191, %v589
    %v1193 = vpop.permute.xlu0 %1192
    %1195 = vset.pattern.permute.xlu0 10
    %1196 = vperm.xlu0 %1195, %v594
    %v1197 = vpop.permute.xlu0 %1196
    %1199 = vset.pattern.permute.xlu0 10
    %1200 = vperm.xlu0 %1199, %v599
    %v1201 = vpop.permute.xlu0 %1200
    %1203 = vset.pattern.permute.xlu0 10
    %1204 = vperm.xlu0 %1203, %v604
    %v1205 = vpop.permute.xlu0 %1204
    %v1207 = vmul.f32 %v1193, %v1187
    %v1208 = vmul.f32 %v1197, %v1188
    %v1209 = vmul.f32 %v1201, %v1189
    %v1210 = vmul.f32 %v1205, %v1190
    %v1211 = vadd.f32 %v1099, %v1207
    %v1212 = vadd.f32 %v1100, %v1208
    %v1213 = vadd.f32 %v1101, %v1209
    %v1214 = vadd.f32 %v1102, %v1210
    %1215 = vset.pattern.permute.xlu0 10
    %1216 = vperm.xlu0 %1215, %v609
    %v1217 = vpop.permute.xlu0 %1216
    %1219 = vset.pattern.permute.xlu0 10
    %1220 = vperm.xlu0 %1219, %v614
    %v1221 = vpop.permute.xlu0 %1220
    %1223 = vset.pattern.permute.xlu0 10
    %1224 = vperm.xlu0 %1223, %v619
    %v1225 = vpop.permute.xlu0 %1224
    %1227 = vset.pattern.permute.xlu0 10
    %1228 = vperm.xlu0 %1227, %v624
    %v1229 = vpop.permute.xlu0 %1228
    %v1231 = vmul.f32 %v1217, %v1187
    %v1232 = vmul.f32 %v1221, %v1188
    %v1233 = vmul.f32 %v1225, %v1189
    %v1234 = vmul.f32 %v1229, %v1190
    %v1235 = vadd.f32 %v1123, %v1231
    %v1236 = vadd.f32 %v1124, %v1232
    %v1237 = vadd.f32 %v1125, %v1233
    %v1238 = vadd.f32 %v1126, %v1234
    %v1239 = vld [vmem:[#allocation3 + $0xb0] sm:$0xf]
    %v1240 = vld [vmem:[#allocation3 + $0xb4] sm:$0xf]
    %v1241 = vld [vmem:[#allocation3 + $0xb8] sm:$0xf]
    %v1242 = vld [vmem:[#allocation3 + $0xbc] sm:$0xf]
    %v1243 = vunpack.c.l.bf16 %v1239
    %v1244 = vunpack.c.l.bf16 %v1240
    %v1245 = vunpack.c.l.bf16 %v1241
    %v1246 = vunpack.c.l.bf16 %v1242
    %1247 = vset.pattern.permute.xlu0 11
    %1248 = vperm.xlu0 %1247, %v589
    %v1249 = vpop.permute.xlu0 %1248
    %1251 = vset.pattern.permute.xlu0 11
    %1252 = vperm.xlu0 %1251, %v594
    %v1253 = vpop.permute.xlu0 %1252
    %1255 = vset.pattern.permute.xlu0 11
    %1256 = vperm.xlu0 %1255, %v599
    %v1257 = vpop.permute.xlu0 %1256
    %1259 = vset.pattern.permute.xlu0 11
    %1260 = vperm.xlu0 %1259, %v604
    %v1261 = vpop.permute.xlu0 %1260
    %v1263 = vmul.f32 %v1249, %v1243
    %v1264 = vmul.f32 %v1253, %v1244
    %v1265 = vmul.f32 %v1257, %v1245
    %v1266 = vmul.f32 %v1261, %v1246
    %v1267 = vadd.f32 %v1155, %v1263
    %v1268 = vadd.f32 %v1156, %v1264
    %v1269 = vadd.f32 %v1157, %v1265
    %v1270 = vadd.f32 %v1158, %v1266
    %1271 = vset.pattern.permute.xlu0 11
    %1272 = vperm.xlu0 %1271, %v609
    %v1273 = vpop.permute.xlu0 %1272
    %1275 = vset.pattern.permute.xlu0 11
    %1276 = vperm.xlu0 %1275, %v614
    %v1277 = vpop.permute.xlu0 %1276
    %1279 = vset.pattern.permute.xlu0 11
    %1280 = vperm.xlu0 %1279, %v619
    %v1281 = vpop.permute.xlu0 %1280
    %1283 = vset.pattern.permute.xlu0 11
    %1284 = vperm.xlu0 %1283, %v624
    %v1285 = vpop.permute.xlu0 %1284
    %v1287 = vmul.f32 %v1273, %v1243
    %v1288 = vmul.f32 %v1277, %v1244
    %v1289 = vmul.f32 %v1281, %v1245
    %v1290 = vmul.f32 %v1285, %v1246
    %v1291 = vadd.f32 %v1179, %v1287
    %v1292 = vadd.f32 %v1180, %v1288
    %v1293 = vadd.f32 %v1181, %v1289
    %v1294 = vadd.f32 %v1182, %v1290
    %v1295 = vld [vmem:[#allocation3 + $0xc0] sm:$0xf]
    %v1296 = vld [vmem:[#allocation3 + $0xc4] sm:$0xf]
    %v1297 = vld [vmem:[#allocation3 + $0xc8] sm:$0xf]
    %v1298 = vld [vmem:[#allocation3 + $0xcc] sm:$0xf]
    %v1299 = vunpack.c.l.bf16 %v1295
    %v1300 = vunpack.c.l.bf16 %v1296
    %v1301 = vunpack.c.l.bf16 %v1297
    %v1302 = vunpack.c.l.bf16 %v1298
    %1303 = vset.pattern.permute.xlu0 12
    %1304 = vperm.xlu0 %1303, %v589
    %v1305 = vpop.permute.xlu0 %1304
    %1307 = vset.pattern.permute.xlu0 12
    %1308 = vperm.xlu0 %1307, %v594
    %v1309 = vpop.permute.xlu0 %1308
    %1311 = vset.pattern.permute.xlu0 12
    %1312 = vperm.xlu0 %1311, %v599
    %v1313 = vpop.permute.xlu0 %1312
    %1315 = vset.pattern.permute.xlu0 12
    %1316 = vperm.xlu0 %1315, %v604
    %v1317 = vpop.permute.xlu0 %1316
    %v1319 = vmul.f32 %v1305, %v1299
    %v1320 = vmul.f32 %v1309, %v1300
    %v1321 = vmul.f32 %v1313, %v1301
    %v1322 = vmul.f32 %v1317, %v1302
    %v1323 = vadd.f32 %v1211, %v1319
    %v1324 = vadd.f32 %v1212, %v1320
    %v1325 = vadd.f32 %v1213, %v1321
    %v1326 = vadd.f32 %v1214, %v1322
    %1327 = vset.pattern.permute.xlu0 12
    %1328 = vperm.xlu0 %1327, %v609
    %v1329 = vpop.permute.xlu0 %1328
    %1331 = vset.pattern.permute.xlu0 12
    %1332 = vperm.xlu0 %1331, %v614
    %v1333 = vpop.permute.xlu0 %1332
    %1335 = vset.pattern.permute.xlu0 12
    %1336 = vperm.xlu0 %1335, %v619
    %v1337 = vpop.permute.xlu0 %1336
    %1339 = vset.pattern.permute.xlu0 12
    %1340 = vperm.xlu0 %1339, %v624
    %v1341 = vpop.permute.xlu0 %1340
    %v1343 = vmul.f32 %v1329, %v1299
    %v1344 = vmul.f32 %v1333, %v1300
    %v1345 = vmul.f32 %v1337, %v1301
    %v1346 = vmul.f32 %v1341, %v1302
    %v1347 = vadd.f32 %v1235, %v1343
    %v1348 = vadd.f32 %v1236, %v1344
    %v1349 = vadd.f32 %v1237, %v1345
    %v1350 = vadd.f32 %v1238, %v1346
    %v1351 = vld [vmem:[#allocation3 + $0xd0] sm:$0xf]
    %v1352 = vld [vmem:[#allocation3 + $0xd4] sm:$0xf]
    %v1353 = vld [vmem:[#allocation3 + $0xd8] sm:$0xf]
    %v1354 = vld [vmem:[#allocation3 + $0xdc] sm:$0xf]
    %v1355 = vunpack.c.l.bf16 %v1351
    %v1356 = vunpack.c.l.bf16 %v1352
    %v1357 = vunpack.c.l.bf16 %v1353
    %v1358 = vunpack.c.l.bf16 %v1354
    %1359 = vset.pattern.permute.xlu0 13
    %1360 = vperm.xlu0 %1359, %v589
    %v1361 = vpop.permute.xlu0 %1360
    %1363 = vset.pattern.permute.xlu0 13
    %1364 = vperm.xlu0 %1363, %v594
    %v1365 = vpop.permute.xlu0 %1364
    %1367 = vset.pattern.permute.xlu0 13
    %1368 = vperm.xlu0 %1367, %v599
    %v1369 = vpop.permute.xlu0 %1368
    %1371 = vset.pattern.permute.xlu0 13
    %1372 = vperm.xlu0 %1371, %v604
    %v1373 = vpop.permute.xlu0 %1372
    %v1375 = vmul.f32 %v1361, %v1355
    %v1376 = vmul.f32 %v1365, %v1356
    %v1377 = vmul.f32 %v1369, %v1357
    %v1378 = vmul.f32 %v1373, %v1358
    %v1379 = vadd.f32 %v1267, %v1375
    %v1380 = vadd.f32 %v1268, %v1376
    %v1381 = vadd.f32 %v1269, %v1377
    %v1382 = vadd.f32 %v1270, %v1378
    %1383 = vset.pattern.permute.xlu0 13
    %1384 = vperm.xlu0 %1383, %v609
    %v1385 = vpop.permute.xlu0 %1384
    %1387 = vset.pattern.permute.xlu0 13
    %1388 = vperm.xlu0 %1387, %v614
    %v1389 = vpop.permute.xlu0 %1388
    %1391 = vset.pattern.permute.xlu0 13
    %1392 = vperm.xlu0 %1391, %v619
    %v1393 = vpop.permute.xlu0 %1392
    %1395 = vset.pattern.permute.xlu0 13
    %1396 = vperm.xlu0 %1395, %v624
    %v1397 = vpop.permute.xlu0 %1396
    %v1399 = vmul.f32 %v1385, %v1355
    %v1400 = vmul.f32 %v1389, %v1356
    %v1401 = vmul.f32 %v1393, %v1357
    %v1402 = vmul.f32 %v1397, %v1358
    %v1403 = vadd.f32 %v1291, %v1399
    %v1404 = vadd.f32 %v1292, %v1400
    %v1405 = vadd.f32 %v1293, %v1401
    %v1406 = vadd.f32 %v1294, %v1402
    %v1407 = vld [vmem:[#allocation3 + $0xe0] sm:$0xf]
    %v1408 = vld [vmem:[#allocation3 + $0xe4] sm:$0xf]
    %v1409 = vld [vmem:[#allocation3 + $0xe8] sm:$0xf]
    %v1410 = vld [vmem:[#allocation3 + $0xec] sm:$0xf]
    %v1411 = vunpack.c.l.bf16 %v1407
    %v1412 = vunpack.c.l.bf16 %v1408
    %v1413 = vunpack.c.l.bf16 %v1409
    %v1414 = vunpack.c.l.bf16 %v1410
    %1415 = vset.pattern.permute.xlu0 14
    %1416 = vperm.xlu0 %1415, %v589
    %v1417 = vpop.permute.xlu0 %1416
    %1419 = vset.pattern.permute.xlu0 14
    %1420 = vperm.xlu0 %1419, %v594
    %v1421 = vpop.permute.xlu0 %1420
    %1423 = vset.pattern.permute.xlu0 14
    %1424 = vperm.xlu0 %1423, %v599
    %v1425 = vpop.permute.xlu0 %1424
    %1427 = vset.pattern.permute.xlu0 14
    %1428 = vperm.xlu0 %1427, %v604
    %v1429 = vpop.permute.xlu0 %1428
    %v1431 = vmul.f32 %v1417, %v1411
    %v1432 = vmul.f32 %v1421, %v1412
    %v1433 = vmul.f32 %v1425, %v1413
    %v1434 = vmul.f32 %v1429, %v1414
    %v1435 = vadd.f32 %v1323, %v1431
    %v1436 = vadd.f32 %v1324, %v1432
    %v1437 = vadd.f32 %v1325, %v1433
    %v1438 = vadd.f32 %v1326, %v1434
    %1439 = vset.pattern.permute.xlu0 14
    %1440 = vperm.xlu0 %1439, %v609
    %v1441 = vpop.permute.xlu0 %1440
    %1443 = vset.pattern.permute.xlu0 14
    %1444 = vperm.xlu0 %1443, %v614
    %v1445 = vpop.permute.xlu0 %1444
    %1447 = vset.pattern.permute.xlu0 14
    %1448 = vperm.xlu0 %1447, %v619
    %v1449 = vpop.permute.xlu0 %1448
    %1451 = vset.pattern.permute.xlu0 14
    %1452 = vperm.xlu0 %1451, %v624
    %v1453 = vpop.permute.xlu0 %1452
    %v1455 = vmul.f32 %v1441, %v1411
    %v1456 = vmul.f32 %v1445, %v1412
    %v1457 = vmul.f32 %v1449, %v1413
    %v1458 = vmul.f32 %v1453, %v1414
    %v1459 = vadd.f32 %v1347, %v1455
    %v1460 = vadd.f32 %v1348, %v1456
    %v1461 = vadd.f32 %v1349, %v1457
    %v1462 = vadd.f32 %v1350, %v1458
    %v1463 = vld [vmem:[#allocation3 + $0xf0] sm:$0xf]
    %v1464 = vld [vmem:[#allocation3 + $0xf4] sm:$0xf]
    %v1465 = vld [vmem:[#allocation3 + $0xf8] sm:$0xf]
    %v1466 = vld [vmem:[#allocation3 + $0xfc] sm:$0xf]
    %v1467 = vunpack.c.l.bf16 %v1463
    %v1468 = vunpack.c.l.bf16 %v1464
    %v1469 = vunpack.c.l.bf16 %v1465
    %v1470 = vunpack.c.l.bf16 %v1466
    %1471 = vset.pattern.permute.xlu0 15
    %1472 = vperm.xlu0 %1471, %v589
    %v1473 = vpop.permute.xlu0 %1472
    %1475 = vset.pattern.permute.xlu0 15
    %1476 = vperm.xlu0 %1475, %v594
    %v1477 = vpop.permute.xlu0 %1476
    %1479 = vset.pattern.permute.xlu0 15
    %1480 = vperm.xlu0 %1479, %v599
    %v1481 = vpop.permute.xlu0 %1480
    %1483 = vset.pattern.permute.xlu0 15
    %1484 = vperm.xlu0 %1483, %v604
    %v1485 = vpop.permute.xlu0 %1484
    %v1487 = vmul.f32 %v1473, %v1467
    %v1488 = vmul.f32 %v1477, %v1468
    %v1489 = vmul.f32 %v1481, %v1469
    %v1490 = vmul.f32 %v1485, %v1470
    %v1491 = vadd.f32 %v1379, %v1487
    %v1492 = vadd.f32 %v1380, %v1488
    %v1493 = vadd.f32 %v1381, %v1489
    %v1494 = vadd.f32 %v1382, %v1490
    %1495 = vset.pattern.permute.xlu0 15
    %1496 = vperm.xlu0 %1495, %v609
    %v1497 = vpop.permute.xlu0 %1496
    %1499 = vset.pattern.permute.xlu0 15
    %1500 = vperm.xlu0 %1499, %v614
    %v1501 = vpop.permute.xlu0 %1500
    %1503 = vset.pattern.permute.xlu0 15
    %1504 = vperm.xlu0 %1503, %v619
    %v1505 = vpop.permute.xlu0 %1504
    %1507 = vset.pattern.permute.xlu0 15
    %1508 = vperm.xlu0 %1507, %v624
    %v1509 = vpop.permute.xlu0 %1508
    %v1511 = vmul.f32 %v1497, %v1467
    %v1512 = vmul.f32 %v1501, %v1468
    %v1513 = vmul.f32 %v1505, %v1469
    %v1514 = vmul.f32 %v1509, %v1470
    %v1515 = vadd.f32 %v1403, %v1511
    %v1516 = vadd.f32 %v1404, %v1512
    %v1517 = vadd.f32 %v1405, %v1513
    %v1518 = vadd.f32 %v1406, %v1514
    %v1519 = vadd.f32 %v1435, %v1491
    %v1520 = vadd.f32 %v1436, %v1492
    %v1521 = vadd.f32 %v1437, %v1493
    %v1522 = vadd.f32 %v1438, %v1494
    %v1523 = vadd.f32 %v1519, %v1520
    %v1524 = vadd.f32 %v1523, %v1521
    %v1525 = vadd.f32 %v1524, %v1522
    %v1526 = vrot.slane %v1525, 4
    %v1527 = vadd.f32 %v1525, %v1526
    %v1528 = vrot.slane %v1527, 2
    %v1529 = vadd.f32 %v1527, %v1528
    %v1530 = vrot.slane %v1529, 1
    %v1531 = vadd.f32 %v1529, %v1530
    %v1532 = vadd.f32 %v1531, %v60
    %v1533 = vmax.f32 %v1532, 0.0
    %v1535 = vrot.slane %v60, 1
    %v1537 = vmul.f32 %v1533, %v1535
    %vm1538 = vcmask 1044484
    %v1539 = vsel %vm1538, %v1537, 0.0
    %1540 = vadd.xlane.f32.xlu0 %v1539
    %v1541 = vpop.xlane.xlu0 %1540
    %v1542 = vrot.slane %v60, 2
    %v1544 = vadd.f32 %v1541, %v1542
    %vm1545 = vcmask 4100
    %1546 = vst.msk [vmem:[%s7 - $0x4] sm:$0x10] %vm1545, %v1544
    %v1547 = vadd.f32 %v1459, %v1515
    %v1548 = vadd.f32 %v1460, %v1516
    %v1549 = vadd.f32 %v1461, %v1517
    %v1550 = vadd.f32 %v1462, %v1518
    %v1551 = vadd.f32 %v1547, %v1548
    %v1552 = vadd.f32 %v1551, %v1549
    %v1553 = vadd.f32 %v1552, %v1550
    %v1554 = vrot.slane %v1553, 4
    %v1555 = vadd.f32 %v1553, %v1554
    %v1556 = vrot.slane %v1555, 2
    %v1557 = vadd.f32 %v1555, %v1556
    %v1558 = vrot.slane %v1557, 1
    %v1559 = vadd.f32 %v1557, %v1558
    %v1560 = vadd.f32 %v1559, %v60
    %v1561 = vmax.f32 %v1560, 0.0
    %v1562 = vmul.f32 %v1561, %v1535
    %v1563 = vsel %vm1538, %v1562, 0.0
    %1564 = vadd.xlane.f32.xlu0 %v1563
    %v1565 = vpop.xlane.xlu0 %1564
    %v1566 = vadd.f32 %v1565, %v1542
    %1567 = vst.msk [vmem:[%s7 - $0x3] sm:$0x10] %vm1545, %v1566
    // Predicated region
    $region38: #{forward.1} parent=1 // pred_check
      _
    $region39: #{forward.1} parent=1 // pred_check_branch
      %1569 = sbr.rel (0) target = $region41
    $region40: #{forward.1} parent=1 // pred_region
      _
    $region41: #{forward.1} parent=1 // pred_fallthru
      _
    // Predicated region
    $region42: #{forward.1} parent=1 // pred_check
      _
    $region43: #{forward.1} parent=1 // pred_check_branch
      %1571 = sbr.rel (0) target = $region45
    $region44: #{forward.1} parent=1 // pred_region
      _
    $region45: #{forward.1} parent=1 // pred_fallthru
      _
    %1572 = vsyncpa [#allocation6], 1
    %1573 = vsyncpa [#allocation8], 1
  %1574 = vsyncmov [#allocation4]
  %s1575 = vpop.sfrf %1574
  %p1576 = scmp.eq.s32.totalorder %s1575, 0
  %p1577 = pneg %p1576
  %1579 = shalt.err (%p1577)

</llo_original>
